<compile_context>
chip_gen: v7x
topology: tpu7x:2x2x1
jax: 0.10.0
libtpu: 0.0.40
codegen_flags: <defaults>
</compile_context>

<pallas_src>
import itertools
import numpy as np
import jax
import jax.numpy as jnp
from jax.experimental import pallas as pl
from jax.experimental.pallas import tpu as pltpu

LANE = 128


def _round_up(x, m):
    return ((x + m - 1) // m) * m


def make_trn_kernel(batch, rel_counts):
    """Kernel body. Ref layout: for each scale s the 7-tuple
    (x_s, w1_s, b1_s, w2_s, b2_s, wc_s, bc_s); the final ref is the output."""
    num_scales = len(rel_counts)

    def kernel(*refs):
        o_ref = refs[-1]
        acc = jnp.zeros(o_ref.shape, jnp.float32)
        for s in range(num_scales):                     # statically unrolled (4 scales)
            x_ref, w1_ref, b1_ref, w2_ref, b2_ref, wc_ref, bc_ref = refs[7 * s:7 * (s + 1)]

            # fc_fusion: ReLU -> Linear -> ReLU -> Dropout -> Linear -> ReLU -> Dropout
            h = jnp.maximum(x_ref[...], 0.0)                                  # nn.ReLU() (f32)
            h = jnp.dot(h.astype(jnp.bfloat16), w1_ref[...],
                        preferred_element_type=jnp.float32) + b1_ref[...]     # Linear K_s->256
            h = jnp.maximum(h, 0.0)                                           # nn.ReLU()
            # nn.Dropout(p=0.6) -> identity (eval mode)
            h = jnp.dot(h.astype(jnp.bfloat16), w2_ref[...],
                        preferred_element_type=jnp.float32) + b2_ref[...]     # Linear 256->256
            h = jnp.maximum(h, 0.0)                                           # nn.ReLU()
            # nn.Dropout(p=0.6) -> identity (eval mode)

            # classifier: Linear 256 -> num_class (lane-padded to 128)
            logits = jnp.dot(h.astype(jnp.bfloat16), wc_ref[...],
                             preferred_element_type=jnp.float32) + bc_ref[...]

            # relations of this scale are stacked along M -> reduce into acc
            for r in range(rel_counts[s]):
                acc = acc + logits[r * batch:(r + 1) * batch, :]

        o_ref[...] = acc          # single lane-dense (B, 128) store

    return kernel


def run_trn_pallas(kernel_inputs, batch, rel_counts, c_pad, cost):
    kernel = make_trn_kernel(batch, rel_counts)
    return pl.pallas_call(
        kernel,
        out_shape=jax.ShapeDtypeStruct((batch, c_pad), jnp.float32),
        in_specs=[pl.BlockSpec(memory_space=pltpu.MemorySpace.VMEM)] * len(kernel_inputs),
        out_specs=pl.BlockSpec(memory_space=pltpu.MemorySpace.VMEM),
        cost_estimate=cost,
    )(*kernel_inputs)


def build_trn(img_feature_dim=64, num_frames=5, num_class=11, num_bottleneck=256,
              subsample_num=3, seed=0):
    """Deterministic parameters + relation bookkeeping (mirrors __init__)."""
    scales = list(range(num_frames, 1, -1))
    relations_scales = [list(itertools.combinations(range(num_frames), s)) for s in scales]
    subsample_scales = [min(subsample_num, len(r)) for r in relations_scales]

    key = jax.random.PRNGKey(seed)
    params = []
    for i, scale in enumerate(scales):
        ks = jax.random.split(jax.random.fold_in(key, i), 6)
        in_dim = scale * img_feature_dim
        w1 = jax.random.normal(ks[0], (in_dim, num_bottleneck), jnp.float32) * 0.02
        b1 = jax.random.normal(ks[1], (num_bottleneck,), jnp.float32) * 0.02
        w2 = jax.random.normal(ks[2], (num_bottleneck, num_bottleneck), jnp.float32) * 0.02
        b2 = jax.random.normal(ks[3], (num_bottleneck,), jnp.float32) * 0.02
        wc = jax.random.normal(ks[4], (num_bottleneck, num_class), jnp.float32) * 0.02
        bc = jax.random.normal(ks[5], (num_class,), jnp.float32) * 0.02
        params.append((w1, b1, w2, b2, wc, bc))

    return scales, relations_scales, subsample_scales, params


def trn_forward(x, scales, relations_scales, subsample_scales, params,
                num_class, num_bottleneck, rng):
    """Gather per-relation inputs grouped by scale, dedup weights, run the kernel."""
    B, T, D = x.shape
    c_pad = _round_up(num_class, LANE)

    # Relation selection exactly as the PyTorch forward (deterministic rng here).
    selected_per_scale = [[relations_scales[0][0]]]          # full-scale relation
    for sid in range(1, len(scales)):
        idxs = rng.choice(len(relations_scales[sid]), subsample_scales[sid], replace=False)
        selected_per_scale.append([relations_scales[sid][int(i)] for i in idxs])

    kernel_inputs = []
    rel_counts = []
    flops = 0
    for sid, rels in enumerate(selected_per_scale):
        scale = scales[sid]
        w1, b1, w2, b2, wc, bc = params[sid]

        # gather selected frames; stack this scale's relations along the M dim
        feats = [x[:, list(fr), :].reshape(B, scale * D) for fr in rels]
        x_s = jnp.concatenate(feats, axis=0)                                   # (R_s*B, K_s) f32

        w1b = w1.astype(jnp.bfloat16)                                          # (K_s, NB)
        w2b = w2.astype(jnp.bfloat16)                                          # (NB, NB)
        wcb = jnp.pad(wc, ((0, 0), (0, c_pad - num_class))).astype(jnp.bfloat16)  # (NB, 128)
        b1b = b1.reshape(1, -1).astype(jnp.float32)
        b2b = b2.reshape(1, -1).astype(jnp.float32)
        bcb = jnp.pad(bc, (0, c_pad - num_class)).reshape(1, -1).astype(jnp.float32)

        kernel_inputs += [x_s, w1b, b1b, w2b, b2b, wcb, bcb]
        rel_counts.append(len(rels))

        M = len(rels) * B
        K = scale * D
        flops += 2 * M * (K * num_bottleneck + num_bottleneck * num_bottleneck
                          + num_bottleneck * c_pad)

    bytes_accessed = sum(int(a.size) * a.dtype.itemsize for a in kernel_inputs) + B * c_pad * 4
    cost = pl.CostEstimate(flops=flops, transcendentals=0, bytes_accessed=bytes_accessed)

    act_pad = run_trn_pallas(kernel_inputs, B, tuple(rel_counts), c_pad, cost)
    act_all = act_pad[:, :num_class]
    return act_all, {"features": x}, (kernel_inputs, rel_counts, c_pad)


def trn_reference(kernel_inputs, batch, rel_counts, c_pad):
    """Pure-JAX reference mirroring the kernel math (same bf16 casts)."""
    acc = jnp.zeros((batch, c_pad), jnp.float32)
    for s in range(len(rel_counts)):
        x, w1, b1, w2, b2, wc, bc = kernel_inputs[7 * s:7 * (s + 1)]
        h = jnp.maximum(x, 0.0)
        h = jnp.maximum(jnp.dot(h.astype(jnp.bfloat16), w1,
                                preferred_element_type=jnp.float32) + b1, 0.0)
        h = jnp.maximum(jnp.dot(h.astype(jnp.bfloat16), w2,
                                preferred_element_type=jnp.float32) + b2, 0.0)
        logits = jnp.dot(h.astype(jnp.bfloat16), wc,
                         preferred_element_type=jnp.float32) + bc
        for r in range(rel_counts[s]):
            acc = acc + logits[r * batch:(r + 1) * batch, :]
    return acc


if __name__ == "__main__":
    B = 2
    NUM_FRAMES = 5
    IMG_FEATURE_DIM = 64
    NUM_CLASS = 11
    NUM_BOTTLENECK = 256

    scales, relations_scales, subsample_scales, params = build_trn(
        img_feature_dim=IMG_FEATURE_DIM, num_frames=NUM_FRAMES,
        num_class=NUM_CLASS, num_bottleneck=NUM_BOTTLENECK, seed=0)

    key = jax.random.PRNGKey(0)
    x = jax.random.normal(key, (B, NUM_FRAMES, IMG_FEATURE_DIM), jnp.float32)

    rng = np.random.default_rng(0)   # deterministic stand-in for np.random.choice
    act_all, extra, (kernel_inputs, rel_counts, c_pad) = trn_forward(
        x, scales, relations_scales, subsample_scales, params,
        NUM_CLASS, NUM_BOTTLENECK, rng)

    act_all = jax.block_until_ready(act_all)

    ref = trn_reference(kernel_inputs, B, rel_counts, c_pad)[:, :NUM_CLASS]
    assert act_all.shape == (B, NUM_CLASS)
    assert extra["features"].shape == x.shape
    np.testing.assert_allclose(np.asarray(act_all), np.asarray(ref), rtol=2e-2, atol=2e-2)

    print("KERNEL_OK")
</pallas_src>

<mosaic_0001>
module attributes {stable_mosaic.version = 11 : i64} {
  func.func @kernel(%arg0: memref<2x320xf32, #tpu.memory_space<vmem>>, %arg1: memref<320x256xbf16, #tpu.memory_space<vmem>>, %arg2: memref<1x256xf32, #tpu.memory_space<vmem>>, %arg3: memref<256x256xbf16, #tpu.memory_space<vmem>>, %arg4: memref<1x256xf32, #tpu.memory_space<vmem>>, %arg5: memref<256x128xbf16, #tpu.memory_space<vmem>>, %arg6: memref<1x128xf32, #tpu.memory_space<vmem>>, %arg7: memref<6x256xf32, #tpu.memory_space<vmem>>, %arg8: memref<256x256xbf16, #tpu.memory_space<vmem>>, %arg9: memref<1x256xf32, #tpu.memory_space<vmem>>, %arg10: memref<256x256xbf16, #tpu.memory_space<vmem>>, %arg11: memref<1x256xf32, #tpu.memory_space<vmem>>, %arg12: memref<256x128xbf16, #tpu.memory_space<vmem>>, %arg13: memref<1x128xf32, #tpu.memory_space<vmem>>, %arg14: memref<6x192xf32, #tpu.memory_space<vmem>>, %arg15: memref<192x256xbf16, #tpu.memory_space<vmem>>, %arg16: memref<1x256xf32, #tpu.memory_space<vmem>>, %arg17: memref<256x256xbf16, #tpu.memory_space<vmem>>, %arg18: memref<1x256xf32, #tpu.memory_space<vmem>>, %arg19: memref<256x128xbf16, #tpu.memory_space<vmem>>, %arg20: memref<1x128xf32, #tpu.memory_space<vmem>>, %arg21: memref<6x128xf32, #tpu.memory_space<vmem>>, %arg22: memref<128x256xbf16, #tpu.memory_space<vmem>>, %arg23: memref<1x256xf32, #tpu.memory_space<vmem>>, %arg24: memref<256x256xbf16, #tpu.memory_space<vmem>>, %arg25: memref<1x256xf32, #tpu.memory_space<vmem>>, %arg26: memref<256x128xbf16, #tpu.memory_space<vmem>>, %arg27: memref<1x128xf32, #tpu.memory_space<vmem>>, %arg28: memref<2x128xf32, #tpu.memory_space<vmem>>) attributes {dimension_semantics = [], scalar_prefetch = 0 : i64, scratch_operands = 0 : i64, tpu.core_type = #tpu.core_type<tc>} {
    %cst = arith.constant 0.000000e+00 : f32
    %0 = vector.broadcast %cst : f32 to vector<2x128xf32>
    %c0 = arith.constant 0 : index
    %c0_0 = arith.constant 0 : index
    %1 = vector.load %arg0[%c0, %c0_0] : memref<2x320xf32, #tpu.memory_space<vmem>>, vector<2x320xf32>
    %cst_1 = arith.constant 0.000000e+00 : f32
    %2 = vector.broadcast %cst_1 : f32 to vector<2x320xf32>
    %3 = arith.maximumf %1, %2 : vector<2x320xf32>
    %4 = arith.truncf %3 : vector<2x320xf32> to vector<2x320xbf16>
    %c0_2 = arith.constant 0 : index
    %c0_3 = arith.constant 0 : index
    %5 = vector.load %arg1[%c0_2, %c0_3] : memref<320x256xbf16, #tpu.memory_space<vmem>>, vector<320x256xbf16>
    %cst_4 = arith.constant dense<0.000000e+00> : vector<2x256xf32>
    %6 = tpu.matmul %4, %5, %cst_4 {dimension_numbers = #tpu.dot_dimension_numbers<[1], [0], [0], [1], [0, 0, 1, 1], [], []>} : vector<2x320xbf16>, vector<320x256xbf16>, vector<2x256xf32> -> vector<2x256xf32>
    %c0_5 = arith.constant 0 : index
    %c0_6 = arith.constant 0 : index
    %7 = vector.load %arg2[%c0_5, %c0_6] : memref<1x256xf32, #tpu.memory_space<vmem>>, vector<1x256xf32>
    %8 = vector.broadcast %7 : vector<1x256xf32> to vector<2x256xf32>
    %9 = arith.addf %6, %8 : vector<2x256xf32>
    %cst_7 = arith.constant 0.000000e+00 : f32
    %10 = vector.broadcast %cst_7 : f32 to vector<2x256xf32>
    %11 = arith.maximumf %9, %10 : vector<2x256xf32>
    %12 = arith.truncf %11 : vector<2x256xf32> to vector<2x256xbf16>
    %c0_8 = arith.constant 0 : index
    %c0_9 = arith.constant 0 : index
    %13 = vector.load %arg3[%c0_8, %c0_9] : memref<256x256xbf16, #tpu.memory_space<vmem>>, vector<256x256xbf16>
    %cst_10 = arith.constant dense<0.000000e+00> : vector<2x256xf32>
    %14 = tpu.matmul %12, %13, %cst_10 {dimension_numbers = #tpu.dot_dimension_numbers<[1], [0], [0], [1], [0, 0, 1, 1], [], []>} : vector<2x256xbf16>, vector<256x256xbf16>, vector<2x256xf32> -> vector<2x256xf32>
    %c0_11 = arith.constant 0 : index
    %c0_12 = arith.constant 0 : index
    %15 = vector.load %arg4[%c0_11, %c0_12] : memref<1x256xf32, #tpu.memory_space<vmem>>, vector<1x256xf32>
    %16 = vector.broadcast %15 : vector<1x256xf32> to vector<2x256xf32>
    %17 = arith.addf %14, %16 : vector<2x256xf32>
    %cst_13 = arith.constant 0.000000e+00 : f32
    %18 = vector.broadcast %cst_13 : f32 to vector<2x256xf32>
    %19 = arith.maximumf %17, %18 : vector<2x256xf32>
    %20 = arith.truncf %19 : vector<2x256xf32> to vector<2x256xbf16>
    %c0_14 = arith.constant 0 : index
    %c0_15 = arith.constant 0 : index
    %21 = vector.load %arg5[%c0_14, %c0_15] : memref<256x128xbf16, #tpu.memory_space<vmem>>, vector<256x128xbf16>
    %cst_16 = arith.constant dense<0.000000e+00> : vector<2x128xf32>
    %22 = tpu.matmul %20, %21, %cst_16 {dimension_numbers = #tpu.dot_dimension_numbers<[1], [0], [0], [1], [0, 0, 1, 1], [], []>} : vector<2x256xbf16>, vector<256x128xbf16>, vector<2x128xf32> -> vector<2x128xf32>
    %c0_17 = arith.constant 0 : index
    %c0_18 = arith.constant 0 : index
    %23 = vector.load %arg6[%c0_17, %c0_18] : memref<1x128xf32, #tpu.memory_space<vmem>>, vector<1x128xf32>
    %24 = vector.broadcast %23 : vector<1x128xf32> to vector<2x128xf32>
    %25 = arith.addf %22, %24 : vector<2x128xf32>
    %26 = arith.addf %0, %25 : vector<2x128xf32>
    %c0_19 = arith.constant 0 : index
    %c0_20 = arith.constant 0 : index
    %27 = vector.load %arg7[%c0_19, %c0_20] : memref<6x256xf32, #tpu.memory_space<vmem>>, vector<6x256xf32>
    %cst_21 = arith.constant 0.000000e+00 : f32
    %28 = vector.broadcast %cst_21 : f32 to vector<6x256xf32>
    %29 = arith.maximumf %27, %28 : vector<6x256xf32>
    %30 = arith.truncf %29 : vector<6x256xf32> to vector<6x256xbf16>
    %c0_22 = arith.constant 0 : index
    %c0_23 = arith.constant 0 : index
    %31 = vector.load %arg8[%c0_22, %c0_23] : memref<256x256xbf16, #tpu.memory_space<vmem>>, vector<256x256xbf16>
    %cst_24 = arith.constant dense<0.000000e+00> : vector<6x256xf32>
    %32 = tpu.matmul %30, %31, %cst_24 {dimension_numbers = #tpu.dot_dimension_numbers<[1], [0], [0], [1], [0, 0, 1, 1], [], []>} : vector<6x256xbf16>, vector<256x256xbf16>, vector<6x256xf32> -> vector<6x256xf32>
    %c0_25 = arith.constant 0 : index
    %c0_26 = arith.constant 0 : index
    %33 = vector.load %arg9[%c0_25, %c0_26] : memref<1x256xf32, #tpu.memory_space<vmem>>, vector<1x256xf32>
    %34 = vector.broadcast %33 : vector<1x256xf32> to vector<6x256xf32>
    %35 = arith.addf %32, %34 : vector<6x256xf32>
    %cst_27 = arith.constant 0.000000e+00 : f32
    %36 = vector.broadcast %cst_27 : f32 to vector<6x256xf32>
    %37 = arith.maximumf %35, %36 : vector<6x256xf32>
    %38 = arith.truncf %37 : vector<6x256xf32> to vector<6x256xbf16>
    %c0_28 = arith.constant 0 : index
    %c0_29 = arith.constant 0 : index
    %39 = vector.load %arg10[%c0_28, %c0_29] : memref<256x256xbf16, #tpu.memory_space<vmem>>, vector<256x256xbf16>
    %cst_30 = arith.constant dense<0.000000e+00> : vector<6x256xf32>
    %40 = tpu.matmul %38, %39, %cst_30 {dimension_numbers = #tpu.dot_dimension_numbers<[1], [0], [0], [1], [0, 0, 1, 1], [], []>} : vector<6x256xbf16>, vector<256x256xbf16>, vector<6x256xf32> -> vector<6x256xf32>
    %c0_31 = arith.constant 0 : index
    %c0_32 = arith.constant 0 : index
    %41 = vector.load %arg11[%c0_31, %c0_32] : memref<1x256xf32, #tpu.memory_space<vmem>>, vector<1x256xf32>
    %42 = vector.broadcast %41 : vector<1x256xf32> to vector<6x256xf32>
    %43 = arith.addf %40, %42 : vector<6x256xf32>
    %cst_33 = arith.constant 0.000000e+00 : f32
    %44 = vector.broadcast %cst_33 : f32 to vector<6x256xf32>
    %45 = arith.maximumf %43, %44 : vector<6x256xf32>
    %46 = arith.truncf %45 : vector<6x256xf32> to vector<6x256xbf16>
    %c0_34 = arith.constant 0 : index
    %c0_35 = arith.constant 0 : index
    %47 = vector.load %arg12[%c0_34, %c0_35] : memref<256x128xbf16, #tpu.memory_space<vmem>>, vector<256x128xbf16>
    %cst_36 = arith.constant dense<0.000000e+00> : vector<6x128xf32>
    %48 = tpu.matmul %46, %47, %cst_36 {dimension_numbers = #tpu.dot_dimension_numbers<[1], [0], [0], [1], [0, 0, 1, 1], [], []>} : vector<6x256xbf16>, vector<256x128xbf16>, vector<6x128xf32> -> vector<6x128xf32>
    %c0_37 = arith.constant 0 : index
    %c0_38 = arith.constant 0 : index
    %49 = vector.load %arg13[%c0_37, %c0_38] : memref<1x128xf32, #tpu.memory_space<vmem>>, vector<1x128xf32>
    %50 = vector.broadcast %49 : vector<1x128xf32> to vector<6x128xf32>
    %51 = arith.addf %48, %50 : vector<6x128xf32>
    %52 = vector.extract_strided_slice %51 {offsets = [0, 0], sizes = [2, 128], strides = [1, 1]} : vector<6x128xf32> to vector<2x128xf32>
    %53 = arith.addf %26, %52 : vector<2x128xf32>
    %54 = vector.extract_strided_slice %51 {offsets = [2, 0], sizes = [2, 128], strides = [1, 1]} : vector<6x128xf32> to vector<2x128xf32>
    %55 = arith.addf %53, %54 : vector<2x128xf32>
    %56 = vector.extract_strided_slice %51 {offsets = [4, 0], sizes = [2, 128], strides = [1, 1]} : vector<6x128xf32> to vector<2x128xf32>
    %57 = arith.addf %55, %56 : vector<2x128xf32>
    %c0_39 = arith.constant 0 : index
    %c0_40 = arith.constant 0 : index
    %58 = vector.load %arg14[%c0_39, %c0_40] : memref<6x192xf32, #tpu.memory_space<vmem>>, vector<6x192xf32>
    %cst_41 = arith.constant 0.000000e+00 : f32
    %59 = vector.broadcast %cst_41 : f32 to vector<6x192xf32>
    %60 = arith.maximumf %58, %59 : vector<6x192xf32>
    %61 = arith.truncf %60 : vector<6x192xf32> to vector<6x192xbf16>
    %c0_42 = arith.constant 0 : index
    %c0_43 = arith.constant 0 : index
    %62 = vector.load %arg15[%c0_42, %c0_43] : memref<192x256xbf16, #tpu.memory_space<vmem>>, vector<192x256xbf16>
    %cst_44 = arith.constant dense<0.000000e+00> : vector<6x256xf32>
    %63 = tpu.matmul %61, %62, %cst_44 {dimension_numbers = #tpu.dot_dimension_numbers<[1], [0], [0], [1], [0, 0, 1, 1], [], []>} : vector<6x192xbf16>, vector<192x256xbf16>, vector<6x256xf32> -> vector<6x256xf32>
    %c0_45 = arith.constant 0 : index
    %c0_46 = arith.constant 0 : index
    %64 = vector.load %arg16[%c0_45, %c0_46] : memref<1x256xf32, #tpu.memory_space<vmem>>, vector<1x256xf32>
    %65 = vector.broadcast %64 : vector<1x256xf32> to vector<6x256xf32>
    %66 = arith.addf %63, %65 : vector<6x256xf32>
    %cst_47 = arith.constant 0.000000e+00 : f32
    %67 = vector.broadcast %cst_47 : f32 to vector<6x256xf32>
    %68 = arith.maximumf %66, %67 : vector<6x256xf32>
    %69 = arith.truncf %68 : vector<6x256xf32> to vector<6x256xbf16>
    %c0_48 = arith.constant 0 : index
    %c0_49 = arith.constant 0 : index
    %70 = vector.load %arg17[%c0_48, %c0_49] : memref<256x256xbf16, #tpu.memory_space<vmem>>, vector<256x256xbf16>
    %cst_50 = arith.constant dense<0.000000e+00> : vector<6x256xf32>
    %71 = tpu.matmul %69, %70, %cst_50 {dimension_numbers = #tpu.dot_dimension_numbers<[1], [0], [0], [1], [0, 0, 1, 1], [], []>} : vector<6x256xbf16>, vector<256x256xbf16>, vector<6x256xf32> -> vector<6x256xf32>
    %c0_51 = arith.constant 0 : index
    %c0_52 = arith.constant 0 : index
    %72 = vector.load %arg18[%c0_51, %c0_52] : memref<1x256xf32, #tpu.memory_space<vmem>>, vector<1x256xf32>
    %73 = vector.broadcast %72 : vector<1x256xf32> to vector<6x256xf32>
    %74 = arith.addf %71, %73 : vector<6x256xf32>
    %cst_53 = arith.constant 0.000000e+00 : f32
    %75 = vector.broadcast %cst_53 : f32 to vector<6x256xf32>
    %76 = arith.maximumf %74, %75 : vector<6x256xf32>
    %77 = arith.truncf %76 : vector<6x256xf32> to vector<6x256xbf16>
    %c0_54 = arith.constant 0 : index
    %c0_55 = arith.constant 0 : index
    %78 = vector.load %arg19[%c0_54, %c0_55] : memref<256x128xbf16, #tpu.memory_space<vmem>>, vector<256x128xbf16>
    %cst_56 = arith.constant dense<0.000000e+00> : vector<6x128xf32>
    %79 = tpu.matmul %77, %78, %cst_56 {dimension_numbers = #tpu.dot_dimension_numbers<[1], [0], [0], [1], [0, 0, 1, 1], [], []>} : vector<6x256xbf16>, vector<256x128xbf16>, vector<6x128xf32> -> vector<6x128xf32>
    %c0_57 = arith.constant 0 : index
    %c0_58 = arith.constant 0 : index
    %80 = vector.load %arg20[%c0_57, %c0_58] : memref<1x128xf32, #tpu.memory_space<vmem>>, vector<1x128xf32>
    %81 = vector.broadcast %80 : vector<1x128xf32> to vector<6x128xf32>
    %82 = arith.addf %79, %81 : vector<6x128xf32>
    %83 = vector.extract_strided_slice %82 {offsets = [0, 0], sizes = [2, 128], strides = [1, 1]} : vector<6x128xf32> to vector<2x128xf32>
    %84 = arith.addf %57, %83 : vector<2x128xf32>
    %85 = vector.extract_strided_slice %82 {offsets = [2, 0], sizes = [2, 128], strides = [1, 1]} : vector<6x128xf32> to vector<2x128xf32>
    %86 = arith.addf %84, %85 : vector<2x128xf32>
    %87 = vector.extract_strided_slice %82 {offsets = [4, 0], sizes = [2, 128], strides = [1, 1]} : vector<6x128xf32> to vector<2x128xf32>
    %88 = arith.addf %86, %87 : vector<2x128xf32>
    %c0_59 = arith.constant 0 : index
    %c0_60 = arith.constant 0 : index
    %89 = vector.load %arg21[%c0_59, %c0_60] : memref<6x128xf32, #tpu.memory_space<vmem>>, vector<6x128xf32>
    %cst_61 = arith.constant 0.000000e+00 : f32
    %90 = vector.broadcast %cst_61 : f32 to vector<6x128xf32>
    %91 = arith.maximumf %89, %90 : vector<6x128xf32>
    %92 = arith.truncf %91 : vector<6x128xf32> to vector<6x128xbf16>
    %c0_62 = arith.constant 0 : index
    %c0_63 = arith.constant 0 : index
    %93 = vector.load %arg22[%c0_62, %c0_63] : memref<128x256xbf16, #tpu.memory_space<vmem>>, vector<128x256xbf16>
    %cst_64 = arith.constant dense<0.000000e+00> : vector<6x256xf32>
    %94 = tpu.matmul %92, %93, %cst_64 {dimension_numbers = #tpu.dot_dimension_numbers<[1], [0], [0], [1], [0, 0, 1, 1], [], []>} : vector<6x128xbf16>, vector<128x256xbf16>, vector<6x256xf32> -> vector<6x256xf32>
    %c0_65 = arith.constant 0 : index
    %c0_66 = arith.constant 0 : index
    %95 = vector.load %arg23[%c0_65, %c0_66] : memref<1x256xf32, #tpu.memory_space<vmem>>, vector<1x256xf32>
    %96 = vector.broadcast %95 : vector<1x256xf32> to vector<6x256xf32>
    %97 = arith.addf %94, %96 : vector<6x256xf32>
    %cst_67 = arith.constant 0.000000e+00 : f32
    %98 = vector.broadcast %cst_67 : f32 to vector<6x256xf32>
    %99 = arith.maximumf %97, %98 : vector<6x256xf32>
    %100 = arith.truncf %99 : vector<6x256xf32> to vector<6x256xbf16>
    %c0_68 = arith.constant 0 : index
    %c0_69 = arith.constant 0 : index
    %101 = vector.load %arg24[%c0_68, %c0_69] : memref<256x256xbf16, #tpu.memory_space<vmem>>, vector<256x256xbf16>
    %cst_70 = arith.constant dense<0.000000e+00> : vector<6x256xf32>
    %102 = tpu.matmul %100, %101, %cst_70 {dimension_numbers = #tpu.dot_dimension_numbers<[1], [0], [0], [1], [0, 0, 1, 1], [], []>} : vector<6x256xbf16>, vector<256x256xbf16>, vector<6x256xf32> -> vector<6x256xf32>
    %c0_71 = arith.constant 0 : index
    %c0_72 = arith.constant 0 : index
    %103 = vector.load %arg25[%c0_71, %c0_72] : memref<1x256xf32, #tpu.memory_space<vmem>>, vector<1x256xf32>
    %104 = vector.broadcast %103 : vector<1x256xf32> to vector<6x256xf32>
    %105 = arith.addf %102, %104 : vector<6x256xf32>
    %cst_73 = arith.constant 0.000000e+00 : f32
    %106 = vector.broadcast %cst_73 : f32 to vector<6x256xf32>
    %107 = arith.maximumf %105, %106 : vector<6x256xf32>
    %108 = arith.truncf %107 : vector<6x256xf32> to vector<6x256xbf16>
    %c0_74 = arith.constant 0 : index
    %c0_75 = arith.constant 0 : index
    %109 = vector.load %arg26[%c0_74, %c0_75] : memref<256x128xbf16, #tpu.memory_space<vmem>>, vector<256x128xbf16>
    %cst_76 = arith.constant dense<0.000000e+00> : vector<6x128xf32>
    %110 = tpu.matmul %108, %109, %cst_76 {dimension_numbers = #tpu.dot_dimension_numbers<[1], [0], [0], [1], [0, 0, 1, 1], [], []>} : vector<6x256xbf16>, vector<256x128xbf16>, vector<6x128xf32> -> vector<6x128xf32>
    %c0_77 = arith.constant 0 : index
    %c0_78 = arith.constant 0 : index
    %111 = vector.load %arg27[%c0_77, %c0_78] : memref<1x128xf32, #tpu.memory_space<vmem>>, vector<1x128xf32>
    %112 = vector.broadcast %111 : vector<1x128xf32> to vector<6x128xf32>
    %113 = arith.addf %110, %112 : vector<6x128xf32>
    %114 = vector.extract_strided_slice %113 {offsets = [0, 0], sizes = [2, 128], strides = [1, 1]} : vector<6x128xf32> to vector<2x128xf32>
    %115 = arith.addf %88, %114 : vector<2x128xf32>
    %116 = vector.extract_strided_slice %113 {offsets = [2, 0], sizes = [2, 128], strides = [1, 1]} : vector<6x128xf32> to vector<2x128xf32>
    %117 = arith.addf %115, %116 : vector<2x128xf32>
    %118 = vector.extract_strided_slice %113 {offsets = [4, 0], sizes = [2, 128], strides = [1, 1]} : vector<6x128xf32> to vector<2x128xf32>
    %119 = arith.addf %117, %118 : vector<2x128xf32>
    %c0_79 = arith.constant 0 : index
    %c0_80 = arith.constant 0 : index
    %120 = vector.load %arg28[%c0_79, %c0_80] : memref<2x128xf32, #tpu.memory_space<vmem>>, vector<2x128xf32>
    tpu.vector_store %arg28[%c0_79, %c0_80], %119 {strides = array<i32>} : memref<2x128xf32, #tpu.memory_space<vmem>>, vector<2x128xf32>,
    return
  }
}

</mosaic_0001>

<llo_original>
// kernel: tpu_custom_call.1
$region0: #{tpu_custom_call.1}
  #allocation0 [shape = 'u32[]', space=smem, size = 0x4, offset = 0x4, fixed_abs, tag = 'smem constant byte address 0x4 - core index']
  #allocation1 [shape = 'u32[144,128]{1,0:T(1,128)}', space=vmem, size = 0x12000, scoped, tag = 'internal scratch']
  %s0 = inlined_call_operand.hbm [shape: f32[2,320], index: 0, kind: input, shape index: {}]
  %s1 = inlined_call_operand.hbm [shape: bf16[320,256], index: 1, kind: input, shape index: {}]
  %s2 = inlined_call_operand.hbm [shape: f32[1,256], index: 2, kind: input, shape index: {}]
  %s3 = inlined_call_operand.hbm [shape: bf16[256,256], index: 3, kind: input, shape index: {}]
  %s4 = inlined_call_operand.hbm [shape: f32[1,256], index: 4, kind: input, shape index: {}]
  %s5 = inlined_call_operand.hbm [shape: bf16[256,128], index: 5, kind: input, shape index: {}]
  %s6 = inlined_call_operand.vmem [shape: f32[1,128], index: 6, kind: input, shape index: {}]
  %s7 = inlined_call_operand.vmem [shape: f32[6,256], index: 7, kind: input, shape index: {}]
  %s8 = inlined_call_operand.hbm [shape: bf16[256,256], index: 8, kind: input, shape index: {}]
  %s9 = inlined_call_operand.hbm [shape: f32[1,256], index: 9, kind: input, shape index: {}]
  %s10 = inlined_call_operand.hbm [shape: bf16[256,256], index: 10, kind: input, shape index: {}]
  %s11 = inlined_call_operand.hbm [shape: f32[1,256], index: 11, kind: input, shape index: {}]
  %s12 = inlined_call_operand.hbm [shape: bf16[256,128], index: 12, kind: input, shape index: {}]
  %s13 = inlined_call_operand.hbm [shape: f32[1,128], index: 13, kind: input, shape index: {}]
  %s14 = inlined_call_operand.vmem [shape: f32[6,192], index: 14, kind: input, shape index: {}]
  %s15 = inlined_call_operand.hbm [shape: bf16[192,256], index: 15, kind: input, shape index: {}]
  %s16 = inlined_call_operand.vmem [shape: f32[1,256], index: 16, kind: input, shape index: {}]
  %s17 = inlined_call_operand.hbm [shape: bf16[256,256], index: 17, kind: input, shape index: {}]
  %s18 = inlined_call_operand.vmem [shape: f32[1,256], index: 18, kind: input, shape index: {}]
  %s19 = inlined_call_operand.hbm [shape: bf16[256,128], index: 19, kind: input, shape index: {}]
  %s20 = inlined_call_operand.vmem [shape: f32[1,128], index: 20, kind: input, shape index: {}]
  %s21 = inlined_call_operand.vmem [shape: f32[6,128], index: 21, kind: input, shape index: {}]
  %s22 = inlined_call_operand.hbm [shape: bf16[128,256], index: 22, kind: input, shape index: {}]
  %s23 = inlined_call_operand.vmem [shape: f32[1,256], index: 23, kind: input, shape index: {}]
  %s24 = inlined_call_operand.hbm [shape: bf16[256,256], index: 24, kind: input, shape index: {}]
  %s25 = inlined_call_operand.vmem [shape: f32[1,256], index: 25, kind: input, shape index: {}]
  %s26 = inlined_call_operand.hbm [shape: bf16[256,128], index: 26, kind: input, shape index: {}]
  %s27 = inlined_call_operand.vmem [shape: f32[1,128], index: 27, kind: input, shape index: {}]
  %s28 = inlined_call_operand.hbm [shape: f32[2,128], index: 28, kind: output, shape index: {}]
  %s29 = sld [smem:[#allocation0]]
  $region194: #{tpu_custom_call.1} parent=0
    _
  %s31 = ssub.s32 1, %s29
  %s32 = scalar_select 0, %s31, %s29
  $region1: #{tpu_custom_call.1} parent=0
    #allocation2 [shape = 'u8[3072]{0}', space=vmem, size = 0xc00, scoped, tag = 'input window, operand 0, single buffered']
    #allocation3 [shape = 's32[1]{0}', space=sflag, size = 0x4, scoped, tag = 'scoped memory for tpu_custom_call.1']
    #allocation4 [shape = 's32[1]{0}', space=sflag, size = 0x4, scoped, tag = 'scoped memory for tpu_custom_call.1']
    #allocation5 [shape = 'u8[163840]{0}', space=vmem, size = 0x28000, scoped, tag = 'input window, operand 1, single buffered']
    #allocation6 [shape = 's32[1]{0}', space=sflag, size = 0x4, scoped, tag = 'scoped memory for tpu_custom_call.1']
    #allocation7 [shape = 'u8[1024]{0}', space=vmem, size = 0x400, scoped, tag = 'input window, operand 2, single buffered']
    #allocation8 [shape = 'u8[131072]{0}', space=vmem, size = 0x20000, scoped, tag = 'input window, operand 3, single buffered']
    #allocation9 [shape = 's32[1]{0}', space=sflag, size = 0x4, scoped, tag = 'scoped memory for tpu_custom_call.1']
    #allocation10 [shape = 'u8[1024]{0}', space=vmem, size = 0x400, scoped, tag = 'input window, operand 4, single buffered']
    #allocation11 [shape = 'u8[65536]{0}', space=vmem, size = 0x10000, scoped, tag = 'input window, operand 5, single buffered']
    #allocation12 [shape = 's32[1]{0}', space=sflag, size = 0x4, scoped, tag = 'scoped memory for tpu_custom_call.1']
    #allocation13 [shape = 'u8[131072]{0}', space=vmem, size = 0x20000, scoped, tag = 'input window, operand 8, single buffered']
    #allocation14 [shape = 'u8[1024]{0}', space=vmem, size = 0x400, scoped, tag = 'input window, operand 9, single buffered']
    #allocation15 [shape = 's32[1]{0}', space=sflag, size = 0x4, scoped, tag = 'scoped memory for tpu_custom_call.1']
    #allocation16 [shape = 'u8[131072]{0}', space=vmem, size = 0x20000, scoped, tag = 'input window, operand 10, single buffered']
    #allocation17 [shape = 'u8[1024]{0}', space=vmem, size = 0x400, scoped, tag = 'input window, operand 11, single buffered']
    #allocation18 [shape = 's32[1]{0}', space=sflag, size = 0x4, scoped, tag = 'scoped memory for tpu_custom_call.1']
    #allocation19 [shape = 'u8[65536]{0}', space=vmem, size = 0x10000, scoped, tag = 'input window, operand 12, single buffered']
    #allocation20 [shape = 'u8[512]{0}', space=vmem, size = 0x400, scoped, tag = 'input window, operand 13, single buffered']
    #allocation21 [shape = 's32[1]{0}', space=sflag, size = 0x4, scoped, tag = 'scoped memory for tpu_custom_call.1']
    #allocation22 [shape = 'u8[98304]{0}', space=vmem, size = 0x18000, scoped, tag = 'input window, operand 15, single buffered']
    #allocation23 [shape = 'u8[131072]{0}', space=vmem, size = 0x20000, scoped, tag = 'input window, operand 17, single buffered']
    #allocation24 [shape = 's32[1]{0}', space=sflag, size = 0x4, scoped, tag = 'scoped memory for tpu_custom_call.1']
    #allocation25 [shape = 'u8[65536]{0}', space=vmem, size = 0x10000, scoped, tag = 'input window, operand 19, single buffered']
    #allocation26 [shape = 'u8[65536]{0}', space=vmem, size = 0x10000, scoped, tag = 'input window, operand 22, single buffered']
    #allocation27 [shape = 's32[1]{0}', space=sflag, size = 0x4, scoped, tag = 'scoped memory for tpu_custom_call.1']
    #allocation28 [shape = 'u8[131072]{0}', space=vmem, size = 0x20000, scoped, tag = 'input window, operand 24, single buffered']
    #allocation29 [shape = 'u8[65536]{0}', space=vmem, size = 0x10000, scoped, tag = 'input window, operand 26, single buffered']
    #allocation30 [shape = 's32[1]{0}', space=sflag, size = 0x4, scoped, tag = 'scoped memory for tpu_custom_call.1']
    #allocation31 [shape = 'u8[1024]{0}', space=vmem, size = 0x400, scoped, tag = 'output window, operand 0, single buffered']
    %33 = vsyncpa [#allocation3], 0
    %34 = vsyncpa [#allocation6], 0
    %35 = vsyncpa [#allocation9], 0
    %36 = vsyncpa [#allocation12], 0
    %37 = vsyncpa [#allocation15], 0
    %38 = vsyncpa [#allocation18], 0
    %39 = vsyncpa [#allocation21], 0
    %40 = vsyncpa [#allocation24], 0
    %41 = vsyncpa [#allocation27], 0
    %42 = vsyncpa [#allocation30], 0
    %43 = vsyncpa [#allocation4], 0
    // Predicated region
    $region2: #{tpu_custom_call.1} parent=1 // pred_check
      _
    $region3: #{tpu_custom_call.1} parent=1 // pred_check_branch
      %45 = sbr.rel (0) target = $region5
    $region4: #{tpu_custom_call.1} parent=1 // pred_region
      %s47 = ssub.s32 96, 96
      %48 = vsyncadd [#allocation3], %s47
      %s50 = sshll.u32 [#allocation2], 4
      %s51 = int_to_ptr.vmem [resolvable:$true] %s50
      %53 = dma.hbm_to_vmem [thread:$0]  %s0, 96, %s51, [#allocation3]
    $region5: #{tpu_custom_call.1} parent=1 // pred_fallthru
      _
    // Predicated region
    $region6: #{tpu_custom_call.1} parent=1 // pred_check
      _
    $region7: #{tpu_custom_call.1} parent=1 // pred_check_branch
      %55 = sbr.rel (0) target = $region9
    $region8: #{tpu_custom_call.1} parent=1 // pred_region
      %s57 = ssub.s32 5120, 5120
      %58 = vsyncadd [#allocation6], %s57
      %s59 = sshll.u32 [#allocation5], 4
      %s60 = int_to_ptr.vmem [resolvable:$true] %s59
      %65 = dma.hbm_to_vmem [thread:$0]  %s1, 5120, %s60, [#allocation6], 128, 128, 8
    $region9: #{tpu_custom_call.1} parent=1 // pred_fallthru
      _
    // Predicated region
    $region10: #{tpu_custom_call.1} parent=1 // pred_check
      _
    $region11: #{tpu_custom_call.1} parent=1 // pred_check_branch
      %67 = sbr.rel (0) target = $region13
    $region12: #{tpu_custom_call.1} parent=1 // pred_region
      %s69 = ssub.s32 32, 32
      %70 = vsyncadd [#allocation6], %s69
      %s72 = sshll.u32 [#allocation7], 4
      %s73 = int_to_ptr.vmem [resolvable:$true] %s72
      %75 = dma.hbm_to_vmem [thread:$0]  %s2, 32, %s73, [#allocation6]
    $region13: #{tpu_custom_call.1} parent=1 // pred_fallthru
      _
    // Predicated region
    $region14: #{tpu_custom_call.1} parent=1 // pred_check
      _
    $region15: #{tpu_custom_call.1} parent=1 // pred_check_branch
      %77 = sbr.rel (0) target = $region17
    $region16: #{tpu_custom_call.1} parent=1 // pred_region
      %s79 = ssub.s32 4096, 4096
      %80 = vsyncadd [#allocation9], %s79
      %s81 = sshll.u32 [#allocation8], 4
      %s82 = int_to_ptr.vmem [resolvable:$true] %s81
      %87 = dma.hbm_to_vmem [thread:$0]  %s3, 4096, %s82, [#allocation9], 128, 128, 8
    $region17: #{tpu_custom_call.1} parent=1 // pred_fallthru
      _
    // Predicated region
    $region18: #{tpu_custom_call.1} parent=1 // pred_check
      _
    $region19: #{tpu_custom_call.1} parent=1 // pred_check_branch
      %89 = sbr.rel (0) target = $region21
    $region20: #{tpu_custom_call.1} parent=1 // pred_region
      %s91 = ssub.s32 32, 32
      %92 = vsyncadd [#allocation9], %s91
      %s94 = sshll.u32 [#allocation10], 4
      %s95 = int_to_ptr.vmem [resolvable:$true] %s94
      %97 = dma.hbm_to_vmem [thread:$0]  %s4, 32, %s95, [#allocation9]
    $region21: #{tpu_custom_call.1} parent=1 // pred_fallthru
      _
    // Predicated region
    $region22: #{tpu_custom_call.1} parent=1 // pred_check
      _
    $region23: #{tpu_custom_call.1} parent=1 // pred_check_branch
      %99 = sbr.rel (0) target = $region25
    $region24: #{tpu_custom_call.1} parent=1 // pred_region
      %s101 = ssub.s32 2048, 2048
      %102 = vsyncadd [#allocation12], %s101
      %s103 = sshll.u32 [#allocation11], 4
      %s104 = int_to_ptr.vmem [resolvable:$true] %s103
      %109 = dma.hbm_to_vmem [thread:$0]  %s5, 2048, %s104, [#allocation12], 64, 64, 4
    $region25: #{tpu_custom_call.1} parent=1 // pred_fallthru
      _
    // Predicated region
    $region26: #{tpu_custom_call.1} parent=1 // pred_check
      _
    $region27: #{tpu_custom_call.1} parent=1 // pred_check_branch
      %111 = sbr.rel (0) target = $region29
    $region28: #{tpu_custom_call.1} parent=1 // pred_region
      _
    $region29: #{tpu_custom_call.1} parent=1 // pred_fallthru
      _
    // Predicated region
    $region30: #{tpu_custom_call.1} parent=1 // pred_check
      _
    $region31: #{tpu_custom_call.1} parent=1 // pred_check_branch
      %113 = sbr.rel (0) target = $region33
    $region32: #{tpu_custom_call.1} parent=1 // pred_region
      _
    $region33: #{tpu_custom_call.1} parent=1 // pred_fallthru
      _
    // Predicated region
    $region34: #{tpu_custom_call.1} parent=1 // pred_check
      _
    $region35: #{tpu_custom_call.1} parent=1 // pred_check_branch
      %115 = sbr.rel (0) target = $region37
    $region36: #{tpu_custom_call.1} parent=1 // pred_region
      %s117 = ssub.s32 4096, 4096
      %118 = vsyncadd [#allocation12], %s117
      %s119 = sshll.u32 [#allocation13], 4
      %s120 = int_to_ptr.vmem [resolvable:$true] %s119
      %125 = dma.hbm_to_vmem [thread:$0]  %s8, 4096, %s120, [#allocation12], 128, 128, 8
    $region37: #{tpu_custom_call.1} parent=1 // pred_fallthru
      _
    // Predicated region
    $region38: #{tpu_custom_call.1} parent=1 // pred_check
      _
    $region39: #{tpu_custom_call.1} parent=1 // pred_check_branch
      %127 = sbr.rel (0) target = $region41
    $region40: #{tpu_custom_call.1} parent=1 // pred_region
      %s129 = ssub.s32 32, 32
      %130 = vsyncadd [#allocation15], %s129
      %s132 = sshll.u32 [#allocation14], 4
      %s133 = int_to_ptr.vmem [resolvable:$true] %s132
      %135 = dma.hbm_to_vmem [thread:$0]  %s9, 32, %s133, [#allocation15]
    $region41: #{tpu_custom_call.1} parent=1 // pred_fallthru
      _
    // Predicated region
    $region42: #{tpu_custom_call.1} parent=1 // pred_check
      _
    $region43: #{tpu_custom_call.1} parent=1 // pred_check_branch
      %137 = sbr.rel (0) target = $region45
    $region44: #{tpu_custom_call.1} parent=1 // pred_region
      %s139 = ssub.s32 4096, 4096
      %140 = vsyncadd [#allocation15], %s139
      %s141 = sshll.u32 [#allocation16], 4
      %s142 = int_to_ptr.vmem [resolvable:$true] %s141
      %147 = dma.hbm_to_vmem [thread:$0]  %s10, 4096, %s142, [#allocation15], 128, 128, 8
    $region45: #{tpu_custom_call.1} parent=1 // pred_fallthru
      _
    // Predicated region
    $region46: #{tpu_custom_call.1} parent=1 // pred_check
      _
    $region47: #{tpu_custom_call.1} parent=1 // pred_check_branch
      %149 = sbr.rel (0) target = $region49
    $region48: #{tpu_custom_call.1} parent=1 // pred_region
      %s151 = ssub.s32 32, 32
      %152 = vsyncadd [#allocation18], %s151
      %s154 = sshll.u32 [#allocation17], 4
      %s155 = int_to_ptr.vmem [resolvable:$true] %s154
      %157 = dma.hbm_to_vmem [thread:$0]  %s11, 32, %s155, [#allocation18]
    $region49: #{tpu_custom_call.1} parent=1 // pred_fallthru
      _
    // Predicated region
    $region50: #{tpu_custom_call.1} parent=1 // pred_check
      _
    $region51: #{tpu_custom_call.1} parent=1 // pred_check_branch
      %159 = sbr.rel (0) target = $region53
    $region52: #{tpu_custom_call.1} parent=1 // pred_region
      %s161 = ssub.s32 2048, 2048
      %162 = vsyncadd [#allocation18], %s161
      %s163 = sshll.u32 [#allocation19], 4
      %s164 = int_to_ptr.vmem [resolvable:$true] %s163
      %169 = dma.hbm_to_vmem [thread:$0]  %s12, 2048, %s164, [#allocation18], 64, 64, 4
    $region53: #{tpu_custom_call.1} parent=1 // pred_fallthru
      _
    // Predicated region
    $region54: #{tpu_custom_call.1} parent=1 // pred_check
      _
    $region55: #{tpu_custom_call.1} parent=1 // pred_check_branch
      %171 = sbr.rel (0) target = $region57
    $region56: #{tpu_custom_call.1} parent=1 // pred_region
      %s173 = ssub.s32 16, 16
      %174 = vsyncadd [#allocation21], %s173
      %s176 = sshll.u32 [#allocation20], 4
      %s177 = int_to_ptr.vmem [resolvable:$true] %s176
      %179 = dma.hbm_to_vmem [thread:$0]  %s13, 16, %s177, [#allocation21]
    $region57: #{tpu_custom_call.1} parent=1 // pred_fallthru
      _
    // Predicated region
    $region58: #{tpu_custom_call.1} parent=1 // pred_check
      _
    $region59: #{tpu_custom_call.1} parent=1 // pred_check_branch
      %181 = sbr.rel (0) target = $region61
    $region60: #{tpu_custom_call.1} parent=1 // pred_region
      _
    $region61: #{tpu_custom_call.1} parent=1 // pred_fallthru
      _
    // Predicated region
    $region62: #{tpu_custom_call.1} parent=1 // pred_check
      _
    $region63: #{tpu_custom_call.1} parent=1 // pred_check_branch
      %183 = sbr.rel (0) target = $region65
    $region64: #{tpu_custom_call.1} parent=1 // pred_region
      %s185 = ssub.s32 3072, 3072
      %186 = vsyncadd [#allocation21], %s185
      %s187 = sshll.u32 [#allocation22], 4
      %s188 = int_to_ptr.vmem [resolvable:$true] %s187
      %193 = dma.hbm_to_vmem [thread:$0]  %s15, 3072, %s188, [#allocation21], 128, 128, 8
    $region65: #{tpu_custom_call.1} parent=1 // pred_fallthru
      _
    // Predicated region
    $region66: #{tpu_custom_call.1} parent=1 // pred_check
      _
    $region67: #{tpu_custom_call.1} parent=1 // pred_check_branch
      %195 = sbr.rel (0) target = $region69
    $region68: #{tpu_custom_call.1} parent=1 // pred_region
      _
    $region69: #{tpu_custom_call.1} parent=1 // pred_fallthru
      _
    // Predicated region
    $region70: #{tpu_custom_call.1} parent=1 // pred_check
      _
    $region71: #{tpu_custom_call.1} parent=1 // pred_check_branch
      %197 = sbr.rel (0) target = $region73
    $region72: #{tpu_custom_call.1} parent=1 // pred_region
      %s199 = ssub.s32 4096, 4096
      %200 = vsyncadd [#allocation24], %s199
      %s201 = sshll.u32 [#allocation23], 4
      %s202 = int_to_ptr.vmem [resolvable:$true] %s201
      %207 = dma.hbm_to_vmem [thread:$0]  %s17, 4096, %s202, [#allocation24], 128, 128, 8
    $region73: #{tpu_custom_call.1} parent=1 // pred_fallthru
      _
    // Predicated region
    $region74: #{tpu_custom_call.1} parent=1 // pred_check
      _
    $region75: #{tpu_custom_call.1} parent=1 // pred_check_branch
      %209 = sbr.rel (0) target = $region77
    $region76: #{tpu_custom_call.1} parent=1 // pred_region
      _
    $region77: #{tpu_custom_call.1} parent=1 // pred_fallthru
      _
    // Predicated region
    $region78: #{tpu_custom_call.1} parent=1 // pred_check
      _
    $region79: #{tpu_custom_call.1} parent=1 // pred_check_branch
      %211 = sbr.rel (0) target = $region81
    $region80: #{tpu_custom_call.1} parent=1 // pred_region
      %s213 = ssub.s32 2048, 2048
      %214 = vsyncadd [#allocation24], %s213
      %s215 = sshll.u32 [#allocation25], 4
      %s216 = int_to_ptr.vmem [resolvable:$true] %s215
      %221 = dma.hbm_to_vmem [thread:$0]  %s19, 2048, %s216, [#allocation24], 64, 64, 4
    $region81: #{tpu_custom_call.1} parent=1 // pred_fallthru
      _
    // Predicated region
    $region82: #{tpu_custom_call.1} parent=1 // pred_check
      _
    $region83: #{tpu_custom_call.1} parent=1 // pred_check_branch
      %223 = sbr.rel (0) target = $region85
    $region84: #{tpu_custom_call.1} parent=1 // pred_region
      _
    $region85: #{tpu_custom_call.1} parent=1 // pred_fallthru
      _
    // Predicated region
    $region86: #{tpu_custom_call.1} parent=1 // pred_check
      _
    $region87: #{tpu_custom_call.1} parent=1 // pred_check_branch
      %225 = sbr.rel (0) target = $region89
    $region88: #{tpu_custom_call.1} parent=1 // pred_region
      _
    $region89: #{tpu_custom_call.1} parent=1 // pred_fallthru
      _
    // Predicated region
    $region90: #{tpu_custom_call.1} parent=1 // pred_check
      _
    $region91: #{tpu_custom_call.1} parent=1 // pred_check_branch
      %227 = sbr.rel (0) target = $region93
    $region92: #{tpu_custom_call.1} parent=1 // pred_region
      %s229 = ssub.s32 2048, 2048
      %230 = vsyncadd [#allocation27], %s229
      %s231 = sshll.u32 [#allocation26], 4
      %s232 = int_to_ptr.vmem [resolvable:$true] %s231
      %237 = dma.hbm_to_vmem [thread:$0]  %s22, 2048, %s232, [#allocation27], 128, 128, 8
    $region93: #{tpu_custom_call.1} parent=1 // pred_fallthru
      _
    // Predicated region
    $region94: #{tpu_custom_call.1} parent=1 // pred_check
      _
    $region95: #{tpu_custom_call.1} parent=1 // pred_check_branch
      %239 = sbr.rel (0) target = $region97
    $region96: #{tpu_custom_call.1} parent=1 // pred_region
      _
    $region97: #{tpu_custom_call.1} parent=1 // pred_fallthru
      _
    // Predicated region
    $region98: #{tpu_custom_call.1} parent=1 // pred_check
      _
    $region99: #{tpu_custom_call.1} parent=1 // pred_check_branch
      %241 = sbr.rel (0) target = $region101
    $region100: #{tpu_custom_call.1} parent=1 // pred_region
      %s243 = ssub.s32 4096, 4096
      %244 = vsyncadd [#allocation27], %s243
      %s245 = sshll.u32 [#allocation28], 4
      %s246 = int_to_ptr.vmem [resolvable:$true] %s245
      %251 = dma.hbm_to_vmem [thread:$0]  %s24, 4096, %s246, [#allocation27], 128, 128, 8
    $region101: #{tpu_custom_call.1} parent=1 // pred_fallthru
      _
    // Predicated region
    $region102: #{tpu_custom_call.1} parent=1 // pred_check
      _
    $region103: #{tpu_custom_call.1} parent=1 // pred_check_branch
      %253 = sbr.rel (0) target = $region105
    $region104: #{tpu_custom_call.1} parent=1 // pred_region
      _
    $region105: #{tpu_custom_call.1} parent=1 // pred_fallthru
      _
    // Predicated region
    $region106: #{tpu_custom_call.1} parent=1 // pred_check
      _
    $region107: #{tpu_custom_call.1} parent=1 // pred_check_branch
      %255 = sbr.rel (0) target = $region109
    $region108: #{tpu_custom_call.1} parent=1 // pred_region
      %s257 = ssub.s32 2048, 2048
      %258 = vsyncadd [#allocation30], %s257
      %s259 = sshll.u32 [#allocation29], 4
      %s260 = int_to_ptr.vmem [resolvable:$true] %s259
      %265 = dma.hbm_to_vmem [thread:$0]  %s26, 2048, %s260, [#allocation30], 64, 64, 4
    $region109: #{tpu_custom_call.1} parent=1 // pred_fallthru
      _
    // Predicated region
    $region110: #{tpu_custom_call.1} parent=1 // pred_check
      _
    $region111: #{tpu_custom_call.1} parent=1 // pred_check_branch
      %267 = sbr.rel (0) target = $region113
    $region112: #{tpu_custom_call.1} parent=1 // pred_region
      _
    $region113: #{tpu_custom_call.1} parent=1 // pred_fallthru
      _
    // Predicated region
    $region114: #{tpu_custom_call.1} parent=1 // pred_check
      _
    $region115: #{tpu_custom_call.1} parent=1 // pred_check_branch
      %269 = sbr.rel (0) target = $region117
    $region116: #{tpu_custom_call.1} parent=1 // pred_region
      %270 = dma.done [#allocation3], 96
    $region117: #{tpu_custom_call.1} parent=1 // pred_fallthru
      _
    // Predicated region
    $region118: #{tpu_custom_call.1} parent=1 // pred_check
      _
    $region119: #{tpu_custom_call.1} parent=1 // pred_check_branch
      %272 = sbr.rel (0) target = $region121
    $region120: #{tpu_custom_call.1} parent=1 // pred_region
      %273 = dma.done [#allocation6], 5120
    $region121: #{tpu_custom_call.1} parent=1 // pred_fallthru
      _
    // Predicated region
    $region122: #{tpu_custom_call.1} parent=1 // pred_check
      _
    $region123: #{tpu_custom_call.1} parent=1 // pred_check_branch
      %275 = sbr.rel (0) target = $region125
    $region124: #{tpu_custom_call.1} parent=1 // pred_region
      %276 = dma.done [#allocation6], 32
    $region125: #{tpu_custom_call.1} parent=1 // pred_fallthru
      _
    // Predicated region
    $region126: #{tpu_custom_call.1} parent=1 // pred_check
      _
    $region127: #{tpu_custom_call.1} parent=1 // pred_check_branch
      %278 = sbr.rel (0) target = $region129
    $region128: #{tpu_custom_call.1} parent=1 // pred_region
      %279 = dma.done [#allocation9], 4096
    $region129: #{tpu_custom_call.1} parent=1 // pred_fallthru
      _
    // Predicated region
    $region130: #{tpu_custom_call.1} parent=1 // pred_check
      _
    $region131: #{tpu_custom_call.1} parent=1 // pred_check_branch
      %281 = sbr.rel (0) target = $region133
    $region132: #{tpu_custom_call.1} parent=1 // pred_region
      %282 = dma.done [#allocation9], 32
    $region133: #{tpu_custom_call.1} parent=1 // pred_fallthru
      _
    // Predicated region
    $region134: #{tpu_custom_call.1} parent=1 // pred_check
      _
    $region135: #{tpu_custom_call.1} parent=1 // pred_check_branch
      %284 = sbr.rel (0) target = $region137
    $region136: #{tpu_custom_call.1} parent=1 // pred_region
      %285 = dma.done [#allocation12], 2048
    $region137: #{tpu_custom_call.1} parent=1 // pred_fallthru
      _
    // Predicated region
    $region138: #{tpu_custom_call.1} parent=1 // pred_check
      _
    $region139: #{tpu_custom_call.1} parent=1 // pred_check_branch
      %287 = sbr.rel (0) target = $region141
    $region140: #{tpu_custom_call.1} parent=1 // pred_region
      %288 = dma.done [#allocation12], 4096
    $region141: #{tpu_custom_call.1} parent=1 // pred_fallthru
      _
    // Predicated region
    $region142: #{tpu_custom_call.1} parent=1 // pred_check
      _
    $region143: #{tpu_custom_call.1} parent=1 // pred_check_branch
      %290 = sbr.rel (0) target = $region145
    $region144: #{tpu_custom_call.1} parent=1 // pred_region
      %291 = dma.done [#allocation15], 32
    $region145: #{tpu_custom_call.1} parent=1 // pred_fallthru
      _
    // Predicated region
    $region146: #{tpu_custom_call.1} parent=1 // pred_check
      _
    $region147: #{tpu_custom_call.1} parent=1 // pred_check_branch
      %293 = sbr.rel (0) target = $region149
    $region148: #{tpu_custom_call.1} parent=1 // pred_region
      %294 = dma.done [#allocation15], 4096
    $region149: #{tpu_custom_call.1} parent=1 // pred_fallthru
      _
    // Predicated region
    $region150: #{tpu_custom_call.1} parent=1 // pred_check
      _
    $region151: #{tpu_custom_call.1} parent=1 // pred_check_branch
      %296 = sbr.rel (0) target = $region153
    $region152: #{tpu_custom_call.1} parent=1 // pred_region
      %297 = dma.done [#allocation18], 32
    $region153: #{tpu_custom_call.1} parent=1 // pred_fallthru
      _
    // Predicated region
    $region154: #{tpu_custom_call.1} parent=1 // pred_check
      _
    $region155: #{tpu_custom_call.1} parent=1 // pred_check_branch
      %299 = sbr.rel (0) target = $region157
    $region156: #{tpu_custom_call.1} parent=1 // pred_region
      %300 = dma.done [#allocation18], 2048
    $region157: #{tpu_custom_call.1} parent=1 // pred_fallthru
      _
    // Predicated region
    $region158: #{tpu_custom_call.1} parent=1 // pred_check
      _
    $region159: #{tpu_custom_call.1} parent=1 // pred_check_branch
      %302 = sbr.rel (0) target = $region161
    $region160: #{tpu_custom_call.1} parent=1 // pred_region
      %303 = dma.done [#allocation21], 16
    $region161: #{tpu_custom_call.1} parent=1 // pred_fallthru
      _
    // Predicated region
    $region162: #{tpu_custom_call.1} parent=1 // pred_check
      _
    $region163: #{tpu_custom_call.1} parent=1 // pred_check_branch
      %305 = sbr.rel (0) target = $region165
    $region164: #{tpu_custom_call.1} parent=1 // pred_region
      %306 = dma.done [#allocation21], 3072
    $region165: #{tpu_custom_call.1} parent=1 // pred_fallthru
      _
    // Predicated region
    $region166: #{tpu_custom_call.1} parent=1 // pred_check
      _
    $region167: #{tpu_custom_call.1} parent=1 // pred_check_branch
      %308 = sbr.rel (0) target = $region169
    $region168: #{tpu_custom_call.1} parent=1 // pred_region
      %309 = dma.done [#allocation24], 4096
    $region169: #{tpu_custom_call.1} parent=1 // pred_fallthru
      _
    // Predicated region
    $region170: #{tpu_custom_call.1} parent=1 // pred_check
      _
    $region171: #{tpu_custom_call.1} parent=1 // pred_check_branch
      %311 = sbr.rel (0) target = $region173
    $region172: #{tpu_custom_call.1} parent=1 // pred_region
      %312 = dma.done [#allocation24], 2048
    $region173: #{tpu_custom_call.1} parent=1 // pred_fallthru
      _
    // Predicated region
    $region174: #{tpu_custom_call.1} parent=1 // pred_check
      _
    $region175: #{tpu_custom_call.1} parent=1 // pred_check_branch
      %314 = sbr.rel (0) target = $region177
    $region176: #{tpu_custom_call.1} parent=1 // pred_region
      %315 = dma.done [#allocation27], 2048
    $region177: #{tpu_custom_call.1} parent=1 // pred_fallthru
      _
    // Predicated region
    $region178: #{tpu_custom_call.1} parent=1 // pred_check
      _
    $region179: #{tpu_custom_call.1} parent=1 // pred_check_branch
      %317 = sbr.rel (0) target = $region181
    $region180: #{tpu_custom_call.1} parent=1 // pred_region
      %318 = dma.done [#allocation27], 4096
    $region181: #{tpu_custom_call.1} parent=1 // pred_fallthru
      _
    // Predicated region
    $region182: #{tpu_custom_call.1} parent=1 // pred_check
      _
    $region183: #{tpu_custom_call.1} parent=1 // pred_check_branch
      %320 = sbr.rel (0) target = $region185
    $region184: #{tpu_custom_call.1} parent=1 // pred_region
      %321 = dma.done [#allocation30], 2048
    $region185: #{tpu_custom_call.1} parent=1 // pred_fallthru
      _
    %v323 = vld [vmem:[#allocation2] sm:$0x3f]
    %v324 = vmax.f32 %v323, 0.0
    %v326 = vcombine.high %v324, %v324
    %v328 = vunpack.c.l.s4 1983009808
    %v329 = vunpack.c.0.s8 %v328
    %v330 = vlaneseq
    %v331 = vshrl.u32 %v330, 7
    %v332 = vsub.s32 %v329, %v331
    %v333 = vrot.slane %v324, %v332
    %v335 = vunpack.c.l.s4 1983009808
    %v336 = vunpack.c.0.s8 %v335
    %v337 = vlaneseq
    %v338 = vshrl.u32 %v337, 7
    %v339 = vsub.s32 %v336, %v338
    %v340 = vrot.slane %v326, %v339
    %v341 = vcombine.high %v333, %v333
    %v345 = vpack.c.bf16 %v333, %v333
    %v346 = vpack.c.bf16 %v341, %v341
    %v347 = vpack.c.bf16 %v340, %v340
    %v348 = vld [vmem:[#allocation5] sm:$0xff]
    %v349 = vld [vmem:[#allocation5 + $0x8] sm:$0xff]
    %v350 = vld [vmem:[#allocation5 + $0x10] sm:$0xff]
    %v351 = vld [vmem:[#allocation5 + $0x18] sm:$0xff]
    %v352 = vld [vmem:[#allocation5 + $0x20] sm:$0xff]
    %v353 = vld [vmem:[#allocation5 + $0x28] sm:$0xff]
    %v354 = vld [vmem:[#allocation5 + $0x30] sm:$0xff]
    %v355 = vld [vmem:[#allocation5 + $0x38] sm:$0xff]
    %v356 = vld [vmem:[#allocation5 + $0x40] sm:$0xff]
    %v357 = vld [vmem:[#allocation5 + $0x48] sm:$0xff]
    %v358 = vld [vmem:[#allocation5 + $0x50] sm:$0xff]
    %v359 = vld [vmem:[#allocation5 + $0x58] sm:$0xff]
    %v360 = vld [vmem:[#allocation5 + $0x60] sm:$0xff]
    %v361 = vld [vmem:[#allocation5 + $0x68] sm:$0xff]
    %v362 = vld [vmem:[#allocation5 + $0x70] sm:$0xff]
    %v363 = vld [vmem:[#allocation5 + $0x78] sm:$0xff]
    %v364 = vld [vmem:[#allocation5 + $0x80] sm:$0xff]
    %v365 = vld [vmem:[#allocation5 + $0x88] sm:$0xff]
    %v366 = vld [vmem:[#allocation5 + $0x90] sm:$0xff]
    %v367 = vld [vmem:[#allocation5 + $0x98] sm:$0xff]
    %v368 = vld [vmem:[#allocation5 + $0xa0] sm:$0xff]
    %v369 = vld [vmem:[#allocation5 + $0xa8] sm:$0xff]
    %v370 = vld [vmem:[#allocation5 + $0xb0] sm:$0xff]
    %v371 = vld [vmem:[#allocation5 + $0xb8] sm:$0xff]
    %v372 = vld [vmem:[#allocation5 + $0xc0] sm:$0xff]
    %v373 = vld [vmem:[#allocation5 + $0xc8] sm:$0xff]
    %v374 = vld [vmem:[#allocation5 + $0xd0] sm:$0xff]
    %v375 = vld [vmem:[#allocation5 + $0xd8] sm:$0xff]
    %v376 = vld [vmem:[#allocation5 + $0xe0] sm:$0xff]
    %v377 = vld [vmem:[#allocation5 + $0xe8] sm:$0xff]
    %v378 = vld [vmem:[#allocation5 + $0xf0] sm:$0xff]
    %v379 = vld [vmem:[#allocation5 + $0xf8] sm:$0xff]
    %v380 = vld [vmem:[#allocation5 + $0x100] sm:$0xff]
    %v381 = vld [vmem:[#allocation5 + $0x108] sm:$0xff]
    %v382 = vld [vmem:[#allocation5 + $0x110] sm:$0xff]
    %v383 = vld [vmem:[#allocation5 + $0x118] sm:$0xff]
    %v384 = vld [vmem:[#allocation5 + $0x120] sm:$0xff]
    %v385 = vld [vmem:[#allocation5 + $0x128] sm:$0xff]
    %v386 = vld [vmem:[#allocation5 + $0x130] sm:$0xff]
    %v387 = vld [vmem:[#allocation5 + $0x138] sm:$0xff]
    %v388 = vld [vmem:[#allocation7] sm:$0x3]
    %v390 = vlaneseq
    %v391 = vshrl.u32 %v390, 7
    %v392 = vsub.s32 0, %v391
    %v393 = vrot.slane %v388, %v392
    %v394 = vlaneseq
    %v395 = vshrl.u32 %v394, 7
    %v396 = vsub.s32 1, %v395
    %v397 = vrot.slane %v388, %v396
    %v440 = vunpack.c.l.b16 %v348
    %v441 = vunpack.c.h.b16 %v348
    %v442 = vunpack.c.l.b16 %v349
    %v443 = vunpack.c.h.b16 %v349
    %v444 = vunpack.c.l.b16 %v350
    %v445 = vunpack.c.h.b16 %v350
    %v446 = vunpack.c.l.b16 %v351
    %v447 = vunpack.c.h.b16 %v351
    %v448 = vunpack.c.l.b16 %v352
    %v449 = vunpack.c.h.b16 %v352
    %v450 = vunpack.c.l.b16 %v353
    %v451 = vunpack.c.h.b16 %v353
    %v452 = vunpack.c.l.b16 %v354
    %v453 = vunpack.c.h.b16 %v354
    %v454 = vunpack.c.l.b16 %v355
    %v455 = vunpack.c.h.b16 %v355
    %v456 = vunpack.c.l.b16 %v356
    %v457 = vunpack.c.h.b16 %v356
    %v458 = vunpack.c.l.b16 %v357
    %v459 = vunpack.c.h.b16 %v357
    %v460 = vunpack.c.l.b16 %v358
    %v461 = vunpack.c.h.b16 %v358
    %v462 = vunpack.c.l.b16 %v359
    %v463 = vunpack.c.h.b16 %v359
    %v464 = vunpack.c.l.b16 %v360
    %v465 = vunpack.c.h.b16 %v360
    %v466 = vunpack.c.l.b16 %v361
    %v467 = vunpack.c.h.b16 %v361
    %v468 = vunpack.c.l.b16 %v362
    %v469 = vunpack.c.h.b16 %v362
    %v470 = vunpack.c.l.b16 %v363
    %v471 = vunpack.c.h.b16 %v363
    %v472 = vunpack.c.l.b16 %v364
    %v473 = vunpack.c.h.b16 %v364
    %v474 = vunpack.c.l.b16 %v365
    %v475 = vunpack.c.h.b16 %v365
    %v476 = vunpack.c.l.b16 %v366
    %v477 = vunpack.c.h.b16 %v366
    %v478 = vunpack.c.l.b16 %v367
    %v479 = vunpack.c.h.b16 %v367
    %v480 = vunpack.c.l.b16 %v368
    %v481 = vunpack.c.h.b16 %v368
    %v482 = vunpack.c.l.b16 %v369
    %v483 = vunpack.c.h.b16 %v369
    %v484 = vunpack.c.l.b16 %v370
    %v485 = vunpack.c.h.b16 %v370
    %v486 = vunpack.c.l.b16 %v371
    %v487 = vunpack.c.h.b16 %v371
    %v488 = vunpack.c.l.b16 %v372
    %v489 = vunpack.c.h.b16 %v372
    %v490 = vunpack.c.l.b16 %v373
    %v491 = vunpack.c.h.b16 %v373
    %v492 = vunpack.c.l.b16 %v374
    %v493 = vunpack.c.h.b16 %v374
    %v494 = vunpack.c.l.b16 %v375
    %v495 = vunpack.c.h.b16 %v375
    %v496 = vunpack.c.l.b16 %v376
    %v497 = vunpack.c.h.b16 %v376
    %v498 = vunpack.c.l.b16 %v377
    %v499 = vunpack.c.h.b16 %v377
    %v500 = vunpack.c.l.b16 %v378
    %v501 = vunpack.c.h.b16 %v378
    %v502 = vunpack.c.l.b16 %v379
    %v503 = vunpack.c.h.b16 %v379
    %v504 = vunpack.c.l.b16 %v380
    %v505 = vunpack.c.h.b16 %v380
    %v506 = vunpack.c.l.b16 %v381
    %v507 = vunpack.c.h.b16 %v381
    %v508 = vunpack.c.l.b16 %v382
    %v509 = vunpack.c.h.b16 %v382
    %v510 = vunpack.c.l.b16 %v383
    %v511 = vunpack.c.h.b16 %v383
    %v512 = vunpack.c.l.b16 %v384
    %v513 = vunpack.c.h.b16 %v384
    %v514 = vunpack.c.l.b16 %v385
    %v515 = vunpack.c.h.b16 %v385
    %v516 = vunpack.c.l.b16 %v386
    %v517 = vunpack.c.h.b16 %v386
    %v518 = vunpack.c.l.b16 %v387
    %v519 = vunpack.c.h.b16 %v387
    %v520 = vpack.c.b16 %v442, %v440
    %v521 = vpack.c.b16 %v443, %v441
    %v522 = vpack.c.b16 %v446, %v444
    %v523 = vpack.c.b16 %v447, %v445
    %v524 = vpack.c.b16 %v450, %v448
    %v525 = vpack.c.b16 %v451, %v449
    %v526 = vpack.c.b16 %v454, %v452
    %v527 = vpack.c.b16 %v455, %v453
    %v528 = vpack.c.b16 %v458, %v456
    %v529 = vpack.c.b16 %v459, %v457
    %v530 = vpack.c.b16 %v462, %v460
    %v531 = vpack.c.b16 %v463, %v461
    %v532 = vpack.c.b16 %v466, %v464
    %v533 = vpack.c.b16 %v467, %v465
    %v534 = vpack.c.b16 %v470, %v468
    %v535 = vpack.c.b16 %v471, %v469
    %v536 = vpack.c.b16 %v474, %v472
    %v537 = vpack.c.b16 %v475, %v473
    %v538 = vpack.c.b16 %v478, %v476
    %v539 = vpack.c.b16 %v479, %v477
    %v540 = vpack.c.b16 %v482, %v480
    %v541 = vpack.c.b16 %v483, %v481
    %v542 = vpack.c.b16 %v486, %v484
    %v543 = vpack.c.b16 %v487, %v485
    %v544 = vpack.c.b16 %v490, %v488
    %v545 = vpack.c.b16 %v491, %v489
    %v546 = vpack.c.b16 %v494, %v492
    %v547 = vpack.c.b16 %v495, %v493
    %v548 = vpack.c.b16 %v498, %v496
    %v549 = vpack.c.b16 %v499, %v497
    %v550 = vpack.c.b16 %v502, %v500
    %v551 = vpack.c.b16 %v503, %v501
    %v552 = vpack.c.b16 %v506, %v504
    %v553 = vpack.c.b16 %v507, %v505
    %v554 = vpack.c.b16 %v510, %v508
    %v555 = vpack.c.b16 %v511, %v509
    %v556 = vpack.c.b16 %v514, %v512
    %v557 = vpack.c.b16 %v515, %v513
    %v558 = vpack.c.b16 %v518, %v516
    %v559 = vpack.c.b16 %v519, %v517
    %vm600 = vcmask 523264
    %v602 = vsel %vm600, %v347, 0
    %604 = vmatprep.subr.bf16.mxu0 %v521
    %605 = vmatpush1.bf16.msra.mxu0 %v520
    %606 = vmatprep.subr.bf16.mxu0 %v523
    %607 = vmatpush1.bf16.msra.mxu0 %v522
    %608 = vmatprep.subr.bf16.mxu0 %v525
    %609 = vmatpush1.bf16.msra.mxu0 %v524
    %610 = vmatprep.subr.bf16.mxu0 %v527
    %611 = vmatpush1.bf16.msra.mxu0 %v526
    %612 = vmatprep.subr.bf16.mxu0 %v529
    %613 = vmatpush1.bf16.msra.mxu0 %v528
    %614 = vmatprep.subr.bf16.mxu0 %v531
    %615 = vmatpush1.bf16.msra.mxu0 %v530
    %616 = vmatprep.subr.bf16.mxu0 %v533
    %617 = vmatpush1.bf16.msra.mxu0 %v532
    %618 = vmatprep.subr.bf16.mxu0 %v535
    %619 = vmatpush1.bf16.msra.mxu0 %v534
    %620 = vmatprep.subr.bf16.mxu0 %v537
    %621 = vmatpush1.bf16.msra.mxu0 %v536
    %622 = vmatprep.subr.bf16.mxu0 %v539
    %623 = vmatpush1.bf16.msra.mxu0 %v538
    %624 = vmatprep.subr.bf16.mxu0 %v541
    %625 = vmatpush1.bf16.msra.mxu0 %v540
    %626 = vmatprep.subr.bf16.mxu0 %v543
    %627 = vmatpush1.bf16.msra.mxu0 %v542
    %628 = vmatprep.subr.bf16.mxu0 %v545
    %629 = vmatpush1.bf16.msra.mxu0 %v544
    %630 = vmatprep.subr.bf16.mxu0 %v547
    %631 = vmatpush1.bf16.msra.mxu0 %v546
    %632 = vmatprep.subr.bf16.mxu0 %v549
    %633 = vmatpush1.bf16.msra.mxu0 %v548
    %634 = vmatprep.subr.bf16.mxu0 %v551
    %635 = vmatpush1.bf16.msra.mxu0 %v550
    %636 = vmatprep.mubr.bf16.mxu0 %v346
    %637 = vmatmul.mubr.bf16.gmra.mrb[0].mxu0 %v345
    %v638 = vpop.f32.mrb[0].mxu0
    %v639 = vadd.f32 %v393, %v638
    %v640 = vpop.f32.mrb[0].mxu0
    %v641 = vadd.f32 %v397, %v640
    %v642 = vpop.f32.mrb[0].mxu0
    %v643 = vpop.f32.mrb[0].mxu0
    %644 = vdwg.mxu0
    %645 = vmatprep.subr.bf16.mxu0 %v553
    %646 = vmatpush1.bf16.msra.mxu0 %v552
    %647 = vmatprep.subr.bf16.mxu0 %v555
    %648 = vmatpush1.bf16.msra.mxu0 %v554
    %649 = vmatprep.subr.bf16.mxu0 %v557
    %650 = vmatpush1.bf16.msra.mxu0 %v556
    %651 = vmatprep.subr.bf16.mxu0 %v559
    %652 = vmatpush1.bf16.msra.mxu0 %v558
    %653 = vmatprep.subr.bf16.mxu0 0
    %654 = vmatpush1.bf16.msra.mxu0 0
    %655 = vmatprep.subr.bf16.mxu0 0
    %656 = vmatpush1.bf16.msra.mxu0 0
    %657 = vmatprep.subr.bf16.mxu0 0
    %658 = vmatpush1.bf16.msra.mxu0 0
    %659 = vmatprep.subr.bf16.mxu0 0
    %660 = vmatpush1.bf16.msra.mxu0 0
    %661 = vmatprep.subr.bf16.mxu0 0
    %662 = vmatpush1.bf16.msra.mxu0 0
    %663 = vmatprep.subr.bf16.mxu0 0
    %664 = vmatpush1.bf16.msra.mxu0 0
    %665 = vmatprep.subr.bf16.mxu0 0
    %666 = vmatpush1.bf16.msra.mxu0 0
    %667 = vmatprep.subr.bf16.mxu0 0
    %668 = vmatpush1.bf16.msra.mxu0 0
    %669 = vmatprep.subr.bf16.mxu0 0
    %670 = vmatpush1.bf16.msra.mxu0 0
    %671 = vmatprep.subr.bf16.mxu0 0
    %672 = vmatpush1.bf16.msra.mxu0 0
    %673 = vmatprep.subr.bf16.mxu0 0
    %674 = vmatpush1.bf16.msra.mxu0 0
    %675 = vmatprep.subr.bf16.mxu0 0
    %676 = vmatpush1.bf16.msra.mxu0 0
    %677 = vmatprep.mubr.bf16.mxu0 0
    %678 = vmatmul.mubr.bf16.gmra.mrb[0].mxu0 %v602
    %v679 = vpop.f32.mrb[0].mxu0
    %v680 = vadd.f32 %v639, %v679
    %v681 = vpop.f32.mrb[0].mxu0
    %v682 = vadd.f32 %v641, %v681
    %v683 = vpop.f32.mrb[0].mxu0
    %v684 = vpop.f32.mrb[0].mxu0
    %685 = vdwg.mxu0
    %v686 = vmax.f32 %v680, 0.0
    %v687 = vmax.f32 %v682, 0.0
    %v688 = vpack.c.bf16 %v686, %v686
    %v689 = vpack.c.bf16 %v687, %v687
    %v690 = vld [vmem:[#allocation8] sm:$0xff]
    %v691 = vld [vmem:[#allocation8 + $0x8] sm:$0xff]
    %v692 = vld [vmem:[#allocation8 + $0x10] sm:$0xff]
    %v693 = vld [vmem:[#allocation8 + $0x18] sm:$0xff]
    %v694 = vld [vmem:[#allocation8 + $0x20] sm:$0xff]
    %v695 = vld [vmem:[#allocation8 + $0x28] sm:$0xff]
    %v696 = vld [vmem:[#allocation8 + $0x30] sm:$0xff]
    %v697 = vld [vmem:[#allocation8 + $0x38] sm:$0xff]
    %v698 = vld [vmem:[#allocation8 + $0x40] sm:$0xff]
    %v699 = vld [vmem:[#allocation8 + $0x48] sm:$0xff]
    %v700 = vld [vmem:[#allocation8 + $0x50] sm:$0xff]
    %v701 = vld [vmem:[#allocation8 + $0x58] sm:$0xff]
    %v702 = vld [vmem:[#allocation8 + $0x60] sm:$0xff]
    %v703 = vld [vmem:[#allocation8 + $0x68] sm:$0xff]
    %v704 = vld [vmem:[#allocation8 + $0x70] sm:$0xff]
    %v705 = vld [vmem:[#allocation8 + $0x78] sm:$0xff]
    %v706 = vld [vmem:[#allocation8 + $0x80] sm:$0xff]
    %v707 = vld [vmem:[#allocation8 + $0x88] sm:$0xff]
    %v708 = vld [vmem:[#allocation8 + $0x90] sm:$0xff]
    %v709 = vld [vmem:[#allocation8 + $0x98] sm:$0xff]
    %v710 = vld [vmem:[#allocation8 + $0xa0] sm:$0xff]
    %v711 = vld [vmem:[#allocation8 + $0xa8] sm:$0xff]
    %v712 = vld [vmem:[#allocation8 + $0xb0] sm:$0xff]
    %v713 = vld [vmem:[#allocation8 + $0xb8] sm:$0xff]
    %v714 = vld [vmem:[#allocation8 + $0xc0] sm:$0xff]
    %v715 = vld [vmem:[#allocation8 + $0xc8] sm:$0xff]
    %v716 = vld [vmem:[#allocation8 + $0xd0] sm:$0xff]
    %v717 = vld [vmem:[#allocation8 + $0xd8] sm:$0xff]
    %v718 = vld [vmem:[#allocation8 + $0xe0] sm:$0xff]
    %v719 = vld [vmem:[#allocation8 + $0xe8] sm:$0xff]
    %v720 = vld [vmem:[#allocation8 + $0xf0] sm:$0xff]
    %v721 = vld [vmem:[#allocation8 + $0xf8] sm:$0xff]
    %v722 = vld [vmem:[#allocation10] sm:$0x3]
    %v724 = vlaneseq
    %v725 = vshrl.u32 %v724, 7
    %v726 = vsub.s32 0, %v725
    %v727 = vrot.slane %v722, %v726
    %v728 = vlaneseq
    %v729 = vshrl.u32 %v728, 7
    %v730 = vsub.s32 1, %v729
    %v731 = vrot.slane %v722, %v730
    %v766 = vunpack.c.l.b16 %v690
    %v767 = vunpack.c.h.b16 %v690
    %v768 = vunpack.c.l.b16 %v691
    %v769 = vunpack.c.h.b16 %v691
    %v770 = vunpack.c.l.b16 %v692
    %v771 = vunpack.c.h.b16 %v692
    %v772 = vunpack.c.l.b16 %v693
    %v773 = vunpack.c.h.b16 %v693
    %v774 = vunpack.c.l.b16 %v694
    %v775 = vunpack.c.h.b16 %v694
    %v776 = vunpack.c.l.b16 %v695
    %v777 = vunpack.c.h.b16 %v695
    %v778 = vunpack.c.l.b16 %v696
    %v779 = vunpack.c.h.b16 %v696
    %v780 = vunpack.c.l.b16 %v697
    %v781 = vunpack.c.h.b16 %v697
    %v782 = vunpack.c.l.b16 %v698
    %v783 = vunpack.c.h.b16 %v698
    %v784 = vunpack.c.l.b16 %v699
    %v785 = vunpack.c.h.b16 %v699
    %v786 = vunpack.c.l.b16 %v700
    %v787 = vunpack.c.h.b16 %v700
    %v788 = vunpack.c.l.b16 %v701
    %v789 = vunpack.c.h.b16 %v701
    %v790 = vunpack.c.l.b16 %v702
    %v791 = vunpack.c.h.b16 %v702
    %v792 = vunpack.c.l.b16 %v703
    %v793 = vunpack.c.h.b16 %v703
    %v794 = vunpack.c.l.b16 %v704
    %v795 = vunpack.c.h.b16 %v704
    %v796 = vunpack.c.l.b16 %v705
    %v797 = vunpack.c.h.b16 %v705
    %v798 = vunpack.c.l.b16 %v706
    %v799 = vunpack.c.h.b16 %v706
    %v800 = vunpack.c.l.b16 %v707
    %v801 = vunpack.c.h.b16 %v707
    %v802 = vunpack.c.l.b16 %v708
    %v803 = vunpack.c.h.b16 %v708
    %v804 = vunpack.c.l.b16 %v709
    %v805 = vunpack.c.h.b16 %v709
    %v806 = vunpack.c.l.b16 %v710
    %v807 = vunpack.c.h.b16 %v710
    %v808 = vunpack.c.l.b16 %v711
    %v809 = vunpack.c.h.b16 %v711
    %v810 = vunpack.c.l.b16 %v712
    %v811 = vunpack.c.h.b16 %v712
    %v812 = vunpack.c.l.b16 %v713
    %v813 = vunpack.c.h.b16 %v713
    %v814 = vunpack.c.l.b16 %v714
    %v815 = vunpack.c.h.b16 %v714
    %v816 = vunpack.c.l.b16 %v715
    %v817 = vunpack.c.h.b16 %v715
    %v818 = vunpack.c.l.b16 %v716
    %v819 = vunpack.c.h.b16 %v716
    %v820 = vunpack.c.l.b16 %v717
    %v821 = vunpack.c.h.b16 %v717
    %v822 = vunpack.c.l.b16 %v718
    %v823 = vunpack.c.h.b16 %v718
    %v824 = vunpack.c.l.b16 %v719
    %v825 = vunpack.c.h.b16 %v719
    %v826 = vunpack.c.l.b16 %v720
    %v827 = vunpack.c.h.b16 %v720
    %v828 = vunpack.c.l.b16 %v721
    %v829 = vunpack.c.h.b16 %v721
    %v830 = vpack.c.b16 %v768, %v766
    %v831 = vpack.c.b16 %v769, %v767
    %v832 = vpack.c.b16 %v772, %v770
    %v833 = vpack.c.b16 %v773, %v771
    %v834 = vpack.c.b16 %v776, %v774
    %v835 = vpack.c.b16 %v777, %v775
    %v836 = vpack.c.b16 %v780, %v778
    %v837 = vpack.c.b16 %v781, %v779
    %v838 = vpack.c.b16 %v784, %v782
    %v839 = vpack.c.b16 %v785, %v783
    %v840 = vpack.c.b16 %v788, %v786
    %v841 = vpack.c.b16 %v789, %v787
    %v842 = vpack.c.b16 %v792, %v790
    %v843 = vpack.c.b16 %v793, %v791
    %v844 = vpack.c.b16 %v796, %v794
    %v845 = vpack.c.b16 %v797, %v795
    %v846 = vpack.c.b16 %v800, %v798
    %v847 = vpack.c.b16 %v801, %v799
    %v848 = vpack.c.b16 %v804, %v802
    %v849 = vpack.c.b16 %v805, %v803
    %v850 = vpack.c.b16 %v808, %v806
    %v851 = vpack.c.b16 %v809, %v807
    %v852 = vpack.c.b16 %v812, %v810
    %v853 = vpack.c.b16 %v813, %v811
    %v854 = vpack.c.b16 %v816, %v814
    %v855 = vpack.c.b16 %v817, %v815
    %v856 = vpack.c.b16 %v820, %v818
    %v857 = vpack.c.b16 %v821, %v819
    %v858 = vpack.c.b16 %v824, %v822
    %v859 = vpack.c.b16 %v825, %v823
    %v860 = vpack.c.b16 %v828, %v826
    %v861 = vpack.c.b16 %v829, %v827
    %894 = vmatprep.subr.bf16.mxu0 %v831
    %895 = vmatpush1.bf16.msra.mxu0 %v830
    %896 = vmatprep.subr.bf16.mxu0 %v833
    %897 = vmatpush1.bf16.msra.mxu0 %v832
    %898 = vmatprep.subr.bf16.mxu0 %v835
    %899 = vmatpush1.bf16.msra.mxu0 %v834
    %900 = vmatprep.subr.bf16.mxu0 %v837
    %901 = vmatpush1.bf16.msra.mxu0 %v836
    %902 = vmatprep.subr.bf16.mxu0 %v839
    %903 = vmatpush1.bf16.msra.mxu0 %v838
    %904 = vmatprep.subr.bf16.mxu0 %v841
    %905 = vmatpush1.bf16.msra.mxu0 %v840
    %906 = vmatprep.subr.bf16.mxu0 %v843
    %907 = vmatpush1.bf16.msra.mxu0 %v842
    %908 = vmatprep.subr.bf16.mxu0 %v845
    %909 = vmatpush1.bf16.msra.mxu0 %v844
    %910 = vmatprep.subr.bf16.mxu0 %v847
    %911 = vmatpush1.bf16.msra.mxu0 %v846
    %912 = vmatprep.subr.bf16.mxu0 %v849
    %913 = vmatpush1.bf16.msra.mxu0 %v848
    %914 = vmatprep.subr.bf16.mxu0 %v851
    %915 = vmatpush1.bf16.msra.mxu0 %v850
    %916 = vmatprep.subr.bf16.mxu0 %v853
    %917 = vmatpush1.bf16.msra.mxu0 %v852
    %918 = vmatprep.subr.bf16.mxu0 %v855
    %919 = vmatpush1.bf16.msra.mxu0 %v854
    %920 = vmatprep.subr.bf16.mxu0 %v857
    %921 = vmatpush1.bf16.msra.mxu0 %v856
    %922 = vmatprep.subr.bf16.mxu0 %v859
    %923 = vmatpush1.bf16.msra.mxu0 %v858
    %924 = vmatprep.subr.bf16.mxu0 %v861
    %925 = vmatpush1.bf16.msra.mxu0 %v860
    %926 = vmatprep.mubr.bf16.mxu0 %v689
    %927 = vmatmul.mubr.bf16.gmra.mrb[0].mxu0 %v688
    %v928 = vpop.f32.mrb[0].mxu0
    %v929 = vadd.f32 %v727, %v928
    %v930 = vpop.f32.mrb[0].mxu0
    %v931 = vadd.f32 %v731, %v930
    %v932 = vpop.f32.mrb[0].mxu0
    %v933 = vpop.f32.mrb[0].mxu0
    %934 = vdwg.mxu0
    %v935 = vmax.f32 %v929, 0.0
    %v936 = vmax.f32 %v931, 0.0
    %v937 = vpack.c.bf16 %v935, %v935
    %v938 = vpack.c.bf16 %v936, %v936
    %v939 = vld [vmem:[#allocation11] sm:$0xf]
    %v940 = vld [vmem:[#allocation11 + $0x4] sm:$0xf]
    %v941 = vld [vmem:[#allocation11 + $0x8] sm:$0xf]
    %v942 = vld [vmem:[#allocation11 + $0xc] sm:$0xf]
    %v943 = vld [vmem:[#allocation11 + $0x10] sm:$0xf]
    %v944 = vld [vmem:[#allocation11 + $0x14] sm:$0xf]
    %v945 = vld [vmem:[#allocation11 + $0x18] sm:$0xf]
    %v946 = vld [vmem:[#allocation11 + $0x1c] sm:$0xf]
    %v947 = vld [vmem:[#allocation11 + $0x20] sm:$0xf]
    %v948 = vld [vmem:[#allocation11 + $0x24] sm:$0xf]
    %v949 = vld [vmem:[#allocation11 + $0x28] sm:$0xf]
    %v950 = vld [vmem:[#allocation11 + $0x2c] sm:$0xf]
    %v951 = vld [vmem:[#allocation11 + $0x30] sm:$0xf]
    %v952 = vld [vmem:[#allocation11 + $0x34] sm:$0xf]
    %v953 = vld [vmem:[#allocation11 + $0x38] sm:$0xf]
    %v954 = vld [vmem:[#allocation11 + $0x3c] sm:$0xf]
    %v955 = vld [vmem:[#allocation11 + $0x40] sm:$0xf]
    %v956 = vld [vmem:[#allocation11 + $0x44] sm:$0xf]
    %v957 = vld [vmem:[#allocation11 + $0x48] sm:$0xf]
    %v958 = vld [vmem:[#allocation11 + $0x4c] sm:$0xf]
    %v959 = vld [vmem:[#allocation11 + $0x50] sm:$0xf]
    %v960 = vld [vmem:[#allocation11 + $0x54] sm:$0xf]
    %v961 = vld [vmem:[#allocation11 + $0x58] sm:$0xf]
    %v962 = vld [vmem:[#allocation11 + $0x5c] sm:$0xf]
    %v963 = vld [vmem:[#allocation11 + $0x60] sm:$0xf]
    %v964 = vld [vmem:[#allocation11 + $0x64] sm:$0xf]
    %v965 = vld [vmem:[#allocation11 + $0x68] sm:$0xf]
    %v966 = vld [vmem:[#allocation11 + $0x6c] sm:$0xf]
    %v967 = vld [vmem:[#allocation11 + $0x70] sm:$0xf]
    %v968 = vld [vmem:[#allocation11 + $0x74] sm:$0xf]
    %v969 = vld [vmem:[#allocation11 + $0x78] sm:$0xf]
    %v970 = vld [vmem:[#allocation11 + $0x7c] sm:$0xf]
    %v971 = vld [vmem:[%s6] sm:$0x1]
    %v973 = vlaneseq
    %v974 = vshrl.u32 %v973, 7
    %v975 = vsub.s32 0, %v974
    %v976 = vrot.slane %v971, %v975
    %v1010 = vunpack.c.l.b16 %v939
    %v1011 = vunpack.c.l.b16 %v940
    %v1012 = vunpack.c.l.b16 %v941
    %v1013 = vunpack.c.l.b16 %v942
    %v1014 = vunpack.c.l.b16 %v943
    %v1015 = vunpack.c.l.b16 %v944
    %v1016 = vunpack.c.l.b16 %v945
    %v1017 = vunpack.c.l.b16 %v946
    %v1018 = vunpack.c.l.b16 %v947
    %v1019 = vunpack.c.l.b16 %v948
    %v1020 = vunpack.c.l.b16 %v949
    %v1021 = vunpack.c.l.b16 %v950
    %v1022 = vunpack.c.l.b16 %v951
    %v1023 = vunpack.c.l.b16 %v952
    %v1024 = vunpack.c.l.b16 %v953
    %v1025 = vunpack.c.l.b16 %v954
    %v1026 = vunpack.c.l.b16 %v955
    %v1027 = vunpack.c.l.b16 %v956
    %v1028 = vunpack.c.l.b16 %v957
    %v1029 = vunpack.c.l.b16 %v958
    %v1030 = vunpack.c.l.b16 %v959
    %v1031 = vunpack.c.l.b16 %v960
    %v1032 = vunpack.c.l.b16 %v961
    %v1033 = vunpack.c.l.b16 %v962
    %v1034 = vunpack.c.l.b16 %v963
    %v1035 = vunpack.c.l.b16 %v964
    %v1036 = vunpack.c.l.b16 %v965
    %v1037 = vunpack.c.l.b16 %v966
    %v1038 = vunpack.c.l.b16 %v967
    %v1039 = vunpack.c.l.b16 %v968
    %v1040 = vunpack.c.l.b16 %v969
    %v1041 = vunpack.c.l.b16 %v970
    %v1042 = vpack.c.b16 %v1011, %v1010
    %v1043 = vpack.c.b16 %v1013, %v1012
    %v1044 = vpack.c.b16 %v1015, %v1014
    %v1045 = vpack.c.b16 %v1017, %v1016
    %v1046 = vpack.c.b16 %v1019, %v1018
    %v1047 = vpack.c.b16 %v1021, %v1020
    %v1048 = vpack.c.b16 %v1023, %v1022
    %v1049 = vpack.c.b16 %v1025, %v1024
    %v1050 = vpack.c.b16 %v1027, %v1026
    %v1051 = vpack.c.b16 %v1029, %v1028
    %v1052 = vpack.c.b16 %v1031, %v1030
    %v1053 = vpack.c.b16 %v1033, %v1032
    %v1054 = vpack.c.b16 %v1035, %v1034
    %v1055 = vpack.c.b16 %v1037, %v1036
    %v1056 = vpack.c.b16 %v1039, %v1038
    %v1057 = vpack.c.b16 %v1041, %v1040
    %1074 = vmatprep.subr.bf16.mxu0 0
    %1075 = vmatpush1.bf16.msra.mxu0 %v1042
    %1076 = vmatprep.subr.bf16.mxu0 0
    %1077 = vmatpush1.bf16.msra.mxu0 %v1043
    %1078 = vmatprep.subr.bf16.mxu0 0
    %1079 = vmatpush1.bf16.msra.mxu0 %v1044
    %1080 = vmatprep.subr.bf16.mxu0 0
    %1081 = vmatpush1.bf16.msra.mxu0 %v1045
    %1082 = vmatprep.subr.bf16.mxu0 0
    %1083 = vmatpush1.bf16.msra.mxu0 %v1046
    %1084 = vmatprep.subr.bf16.mxu0 0
    %1085 = vmatpush1.bf16.msra.mxu0 %v1047
    %1086 = vmatprep.subr.bf16.mxu0 0
    %1087 = vmatpush1.bf16.msra.mxu0 %v1048
    %1088 = vmatprep.subr.bf16.mxu0 0
    %1089 = vmatpush1.bf16.msra.mxu0 %v1049
    %1090 = vmatprep.subr.bf16.mxu0 0
    %1091 = vmatpush1.bf16.msra.mxu0 %v1050
    %1092 = vmatprep.subr.bf16.mxu0 0
    %1093 = vmatpush1.bf16.msra.mxu0 %v1051
    %1094 = vmatprep.subr.bf16.mxu0 0
    %1095 = vmatpush1.bf16.msra.mxu0 %v1052
    %1096 = vmatprep.subr.bf16.mxu0 0
    %1097 = vmatpush1.bf16.msra.mxu0 %v1053
    %1098 = vmatprep.subr.bf16.mxu0 0
    %1099 = vmatpush1.bf16.msra.mxu0 %v1054
    %1100 = vmatprep.subr.bf16.mxu0 0
    %1101 = vmatpush1.bf16.msra.mxu0 %v1055
    %1102 = vmatprep.subr.bf16.mxu0 0
    %1103 = vmatpush1.bf16.msra.mxu0 %v1056
    %1104 = vmatprep.subr.bf16.mxu0 0
    %1105 = vmatpush1.bf16.msra.mxu0 %v1057
    %1106 = vmatprep.mubr.bf16.mxu0 %v938
    %1107 = vmatmul.mubr.bf16.gmra.mrb[0].mxu0 %v937
    %v1108 = vpop.f32.mrb[0].mxu0
    %v1109 = vadd.f32 %v976, %v1108
    %v1110 = vpop.f32.mrb[0].mxu0
    %v1111 = vpop.f32.mrb[0].mxu0
    %v1112 = vpop.f32.mrb[0].mxu0
    %1113 = vdwg.mxu0
    %v1114 = vadd.f32 %v1109, 0.0
    %v1115 = vld [vmem:[%s7] sm:$0x3f]
    %v1116 = vld [vmem:[%s7 + $0x8] sm:$0x3f]
    %v1117 = vmax.f32 %v1115, 0.0
    %v1118 = vmax.f32 %v1116, 0.0
    %v1119 = vpack.c.bf16 %v1117, %v1117
    %v1120 = vpack.c.bf16 %v1118, %v1118
    %v1121 = vld [vmem:[#allocation13] sm:$0xff]
    %v1122 = vld [vmem:[#allocation13 + $0x8] sm:$0xff]
    %v1123 = vld [vmem:[#allocation13 + $0x10] sm:$0xff]
    %v1124 = vld [vmem:[#allocation13 + $0x18] sm:$0xff]
    %v1125 = vld [vmem:[#allocation13 + $0x20] sm:$0xff]
    %v1126 = vld [vmem:[#allocation13 + $0x28] sm:$0xff]
    %v1127 = vld [vmem:[#allocation13 + $0x30] sm:$0xff]
    %v1128 = vld [vmem:[#allocation13 + $0x38] sm:$0xff]
    %v1129 = vld [vmem:[#allocation13 + $0x40] sm:$0xff]
    %v1130 = vld [vmem:[#allocation13 + $0x48] sm:$0xff]
    %v1131 = vld [vmem:[#allocation13 + $0x50] sm:$0xff]
    %v1132 = vld [vmem:[#allocation13 + $0x58] sm:$0xff]
    %v1133 = vld [vmem:[#allocation13 + $0x60] sm:$0xff]
    %v1134 = vld [vmem:[#allocation13 + $0x68] sm:$0xff]
    %v1135 = vld [vmem:[#allocation13 + $0x70] sm:$0xff]
    %v1136 = vld [vmem:[#allocation13 + $0x78] sm:$0xff]
    %v1137 = vld [vmem:[#allocation13 + $0x80] sm:$0xff]
    %v1138 = vld [vmem:[#allocation13 + $0x88] sm:$0xff]
    %v1139 = vld [vmem:[#allocation13 + $0x90] sm:$0xff]
    %v1140 = vld [vmem:[#allocation13 + $0x98] sm:$0xff]
    %v1141 = vld [vmem:[#allocation13 + $0xa0] sm:$0xff]
    %v1142 = vld [vmem:[#allocation13 + $0xa8] sm:$0xff]
    %v1143 = vld [vmem:[#allocation13 + $0xb0] sm:$0xff]
    %v1144 = vld [vmem:[#allocation13 + $0xb8] sm:$0xff]
    %v1145 = vld [vmem:[#allocation13 + $0xc0] sm:$0xff]
    %v1146 = vld [vmem:[#allocation13 + $0xc8] sm:$0xff]
    %v1147 = vld [vmem:[#allocation13 + $0xd0] sm:$0xff]
    %v1148 = vld [vmem:[#allocation13 + $0xd8] sm:$0xff]
    %v1149 = vld [vmem:[#allocation13 + $0xe0] sm:$0xff]
    %v1150 = vld [vmem:[#allocation13 + $0xe8] sm:$0xff]
    %v1151 = vld [vmem:[#allocation13 + $0xf0] sm:$0xff]
    %v1152 = vld [vmem:[#allocation13 + $0xf8] sm:$0xff]
    %v1153 = vld [vmem:[#allocation14] sm:$0x3]
    %v1155 = vlaneseq
    %v1156 = vshrl.u32 %v1155, 7
    %v1157 = vsub.s32 0, %v1156
    %v1158 = vrot.slane %v1153, %v1157
    %v1159 = vlaneseq
    %v1160 = vshrl.u32 %v1159, 7
    %v1161 = vsub.s32 1, %v1160
    %v1162 = vrot.slane %v1153, %v1161
    %v1197 = vunpack.c.l.b16 %v1121
    %v1198 = vunpack.c.h.b16 %v1121
    %v1199 = vunpack.c.l.b16 %v1122
    %v1200 = vunpack.c.h.b16 %v1122
    %v1201 = vunpack.c.l.b16 %v1123
    %v1202 = vunpack.c.h.b16 %v1123
    %v1203 = vunpack.c.l.b16 %v1124
    %v1204 = vunpack.c.h.b16 %v1124
    %v1205 = vunpack.c.l.b16 %v1125
    %v1206 = vunpack.c.h.b16 %v1125
    %v1207 = vunpack.c.l.b16 %v1126
    %v1208 = vunpack.c.h.b16 %v1126
    %v1209 = vunpack.c.l.b16 %v1127
    %v1210 = vunpack.c.h.b16 %v1127
    %v1211 = vunpack.c.l.b16 %v1128
    %v1212 = vunpack.c.h.b16 %v1128
    %v1213 = vunpack.c.l.b16 %v1129
    %v1214 = vunpack.c.h.b16 %v1129
    %v1215 = vunpack.c.l.b16 %v1130
    %v1216 = vunpack.c.h.b16 %v1130
    %v1217 = vunpack.c.l.b16 %v1131
    %v1218 = vunpack.c.h.b16 %v1131
    %v1219 = vunpack.c.l.b16 %v1132
    %v1220 = vunpack.c.h.b16 %v1132
    %v1221 = vunpack.c.l.b16 %v1133
    %v1222 = vunpack.c.h.b16 %v1133
    %v1223 = vunpack.c.l.b16 %v1134
    %v1224 = vunpack.c.h.b16 %v1134
    %v1225 = vunpack.c.l.b16 %v1135
    %v1226 = vunpack.c.h.b16 %v1135
    %v1227 = vunpack.c.l.b16 %v1136
    %v1228 = vunpack.c.h.b16 %v1136
    %v1229 = vunpack.c.l.b16 %v1137
    %v1230 = vunpack.c.h.b16 %v1137
    %v1231 = vunpack.c.l.b16 %v1138
    %v1232 = vunpack.c.h.b16 %v1138
    %v1233 = vunpack.c.l.b16 %v1139
    %v1234 = vunpack.c.h.b16 %v1139
    %v1235 = vunpack.c.l.b16 %v1140
    %v1236 = vunpack.c.h.b16 %v1140
    %v1237 = vunpack.c.l.b16 %v1141
    %v1238 = vunpack.c.h.b16 %v1141
    %v1239 = vunpack.c.l.b16 %v1142
    %v1240 = vunpack.c.h.b16 %v1142
    %v1241 = vunpack.c.l.b16 %v1143
    %v1242 = vunpack.c.h.b16 %v1143
    %v1243 = vunpack.c.l.b16 %v1144
    %v1244 = vunpack.c.h.b16 %v1144
    %v1245 = vunpack.c.l.b16 %v1145
    %v1246 = vunpack.c.h.b16 %v1145
    %v1247 = vunpack.c.l.b16 %v1146
    %v1248 = vunpack.c.h.b16 %v1146
    %v1249 = vunpack.c.l.b16 %v1147
    %v1250 = vunpack.c.h.b16 %v1147
    %v1251 = vunpack.c.l.b16 %v1148
    %v1252 = vunpack.c.h.b16 %v1148
    %v1253 = vunpack.c.l.b16 %v1149
    %v1254 = vunpack.c.h.b16 %v1149
    %v1255 = vunpack.c.l.b16 %v1150
    %v1256 = vunpack.c.h.b16 %v1150
    %v1257 = vunpack.c.l.b16 %v1151
    %v1258 = vunpack.c.h.b16 %v1151
    %v1259 = vunpack.c.l.b16 %v1152
    %v1260 = vunpack.c.h.b16 %v1152
    %v1261 = vpack.c.b16 %v1199, %v1197
    %v1262 = vpack.c.b16 %v1200, %v1198
    %v1263 = vpack.c.b16 %v1203, %v1201
    %v1264 = vpack.c.b16 %v1204, %v1202
    %v1265 = vpack.c.b16 %v1207, %v1205
    %v1266 = vpack.c.b16 %v1208, %v1206
    %v1267 = vpack.c.b16 %v1211, %v1209
    %v1268 = vpack.c.b16 %v1212, %v1210
    %v1269 = vpack.c.b16 %v1215, %v1213
    %v1270 = vpack.c.b16 %v1216, %v1214
    %v1271 = vpack.c.b16 %v1219, %v1217
    %v1272 = vpack.c.b16 %v1220, %v1218
    %v1273 = vpack.c.b16 %v1223, %v1221
    %v1274 = vpack.c.b16 %v1224, %v1222
    %v1275 = vpack.c.b16 %v1227, %v1225
    %v1276 = vpack.c.b16 %v1228, %v1226
    %v1277 = vpack.c.b16 %v1231, %v1229
    %v1278 = vpack.c.b16 %v1232, %v1230
    %v1279 = vpack.c.b16 %v1235, %v1233
    %v1280 = vpack.c.b16 %v1236, %v1234
    %v1281 = vpack.c.b16 %v1239, %v1237
    %v1282 = vpack.c.b16 %v1240, %v1238
    %v1283 = vpack.c.b16 %v1243, %v1241
    %v1284 = vpack.c.b16 %v1244, %v1242
    %v1285 = vpack.c.b16 %v1247, %v1245
    %v1286 = vpack.c.b16 %v1248, %v1246
    %v1287 = vpack.c.b16 %v1251, %v1249
    %v1288 = vpack.c.b16 %v1252, %v1250
    %v1289 = vpack.c.b16 %v1255, %v1253
    %v1290 = vpack.c.b16 %v1256, %v1254
    %v1291 = vpack.c.b16 %v1259, %v1257
    %v1292 = vpack.c.b16 %v1260, %v1258
    %1325 = vmatprep.subr.bf16.mxu0 %v1262
    %1326 = vmatpush1.bf16.msra.mxu0 %v1261
    %1327 = vmatprep.subr.bf16.mxu0 %v1264
    %1328 = vmatpush1.bf16.msra.mxu0 %v1263
    %1329 = vmatprep.subr.bf16.mxu0 %v1266
    %1330 = vmatpush1.bf16.msra.mxu0 %v1265
    %1331 = vmatprep.subr.bf16.mxu0 %v1268
    %1332 = vmatpush1.bf16.msra.mxu0 %v1267
    %1333 = vmatprep.subr.bf16.mxu0 %v1270
    %1334 = vmatpush1.bf16.msra.mxu0 %v1269
    %1335 = vmatprep.subr.bf16.mxu0 %v1272
    %1336 = vmatpush1.bf16.msra.mxu0 %v1271
    %1337 = vmatprep.subr.bf16.mxu0 %v1274
    %1338 = vmatpush1.bf16.msra.mxu0 %v1273
    %1339 = vmatprep.subr.bf16.mxu0 %v1276
    %1340 = vmatpush1.bf16.msra.mxu0 %v1275
    %1341 = vmatprep.subr.bf16.mxu0 %v1278
    %1342 = vmatpush1.bf16.msra.mxu0 %v1277
    %1343 = vmatprep.subr.bf16.mxu0 %v1280
    %1344 = vmatpush1.bf16.msra.mxu0 %v1279
    %1345 = vmatprep.subr.bf16.mxu0 %v1282
    %1346 = vmatpush1.bf16.msra.mxu0 %v1281
    %1347 = vmatprep.subr.bf16.mxu0 %v1284
    %1348 = vmatpush1.bf16.msra.mxu0 %v1283
    %1349 = vmatprep.subr.bf16.mxu0 %v1286
    %1350 = vmatpush1.bf16.msra.mxu0 %v1285
    %1351 = vmatprep.subr.bf16.mxu0 %v1288
    %1352 = vmatpush1.bf16.msra.mxu0 %v1287
    %1353 = vmatprep.subr.bf16.mxu0 %v1290
    %1354 = vmatpush1.bf16.msra.mxu0 %v1289
    %1355 = vmatprep.subr.bf16.mxu0 %v1292
    %1356 = vmatpush1.bf16.msra.mxu0 %v1291
    %1357 = vmatprep.mubr.bf16.mxu0 %v1120
    %1358 = vmatmul.mubr.bf16.gmra.mrb[0].mxu0 %v1119
    %v1359 = vpop.f32.mrb[0].mxu0
    %v1360 = vadd.f32 %v1158, %v1359
    %v1361 = vpop.f32.mrb[0].mxu0
    %v1362 = vadd.f32 %v1162, %v1361
    %v1363 = vpop.f32.mrb[0].mxu0
    %v1364 = vpop.f32.mrb[0].mxu0
    %1365 = vdwg.mxu0
    %v1366 = vmax.f32 %v1360, 0.0
    %v1367 = vmax.f32 %v1362, 0.0
    %v1368 = vpack.c.bf16 %v1366, %v1366
    %v1369 = vpack.c.bf16 %v1367, %v1367
    %v1370 = vld [vmem:[#allocation16] sm:$0xff]
    %v1371 = vld [vmem:[#allocation16 + $0x8] sm:$0xff]
    %v1372 = vld [vmem:[#allocation16 + $0x10] sm:$0xff]
    %v1373 = vld [vmem:[#allocation16 + $0x18] sm:$0xff]
    %v1374 = vld [vmem:[#allocation16 + $0x20] sm:$0xff]
    %v1375 = vld [vmem:[#allocation16 + $0x28] sm:$0xff]
    %v1376 = vld [vmem:[#allocation16 + $0x30] sm:$0xff]
    %v1377 = vld [vmem:[#allocation16 + $0x38] sm:$0xff]
    %v1378 = vld [vmem:[#allocation16 + $0x40] sm:$0xff]
    %v1379 = vld [vmem:[#allocation16 + $0x48] sm:$0xff]
    %v1380 = vld [vmem:[#allocation16 + $0x50] sm:$0xff]
    %v1381 = vld [vmem:[#allocation16 + $0x58] sm:$0xff]
    %v1382 = vld [vmem:[#allocation16 + $0x60] sm:$0xff]
    %v1383 = vld [vmem:[#allocation16 + $0x68] sm:$0xff]
    %v1384 = vld [vmem:[#allocation16 + $0x70] sm:$0xff]
    %v1385 = vld [vmem:[#allocation16 + $0x78] sm:$0xff]
    %v1386 = vld [vmem:[#allocation16 + $0x80] sm:$0xff]
    %v1387 = vld [vmem:[#allocation16 + $0x88] sm:$0xff]
    %v1388 = vld [vmem:[#allocation16 + $0x90] sm:$0xff]
    %v1389 = vld [vmem:[#allocation16 + $0x98] sm:$0xff]
    %v1390 = vld [vmem:[#allocation16 + $0xa0] sm:$0xff]
    %v1391 = vld [vmem:[#allocation16 + $0xa8] sm:$0xff]
    %v1392 = vld [vmem:[#allocation16 + $0xb0] sm:$0xff]
    %v1393 = vld [vmem:[#allocation16 + $0xb8] sm:$0xff]
    %v1394 = vld [vmem:[#allocation16 + $0xc0] sm:$0xff]
    %v1395 = vld [vmem:[#allocation16 + $0xc8] sm:$0xff]
    %v1396 = vld [vmem:[#allocation16 + $0xd0] sm:$0xff]
    %v1397 = vld [vmem:[#allocation16 + $0xd8] sm:$0xff]
    %v1398 = vld [vmem:[#allocation16 + $0xe0] sm:$0xff]
    %v1399 = vld [vmem:[#allocation16 + $0xe8] sm:$0xff]
    %v1400 = vld [vmem:[#allocation16 + $0xf0] sm:$0xff]
    %v1401 = vld [vmem:[#allocation16 + $0xf8] sm:$0xff]
    %v1402 = vld [vmem:[#allocation17] sm:$0x3]
    %v1404 = vlaneseq
    %v1405 = vshrl.u32 %v1404, 7
    %v1406 = vsub.s32 0, %v1405
    %v1407 = vrot.slane %v1402, %v1406
    %v1408 = vlaneseq
    %v1409 = vshrl.u32 %v1408, 7
    %v1410 = vsub.s32 1, %v1409
    %v1411 = vrot.slane %v1402, %v1410
    %v1446 = vunpack.c.l.b16 %v1370
    %v1447 = vunpack.c.h.b16 %v1370
    %v1448 = vunpack.c.l.b16 %v1371
    %v1449 = vunpack.c.h.b16 %v1371
    %v1450 = vunpack.c.l.b16 %v1372
    %v1451 = vunpack.c.h.b16 %v1372
    %v1452 = vunpack.c.l.b16 %v1373
    %v1453 = vunpack.c.h.b16 %v1373
    %v1454 = vunpack.c.l.b16 %v1374
    %v1455 = vunpack.c.h.b16 %v1374
    %v1456 = vunpack.c.l.b16 %v1375
    %v1457 = vunpack.c.h.b16 %v1375
    %v1458 = vunpack.c.l.b16 %v1376
    %v1459 = vunpack.c.h.b16 %v1376
    %v1460 = vunpack.c.l.b16 %v1377
    %v1461 = vunpack.c.h.b16 %v1377
    %v1462 = vunpack.c.l.b16 %v1378
    %v1463 = vunpack.c.h.b16 %v1378
    %v1464 = vunpack.c.l.b16 %v1379
    %v1465 = vunpack.c.h.b16 %v1379
    %v1466 = vunpack.c.l.b16 %v1380
    %v1467 = vunpack.c.h.b16 %v1380
    %v1468 = vunpack.c.l.b16 %v1381
    %v1469 = vunpack.c.h.b16 %v1381
    %v1470 = vunpack.c.l.b16 %v1382
    %v1471 = vunpack.c.h.b16 %v1382
    %v1472 = vunpack.c.l.b16 %v1383
    %v1473 = vunpack.c.h.b16 %v1383
    %v1474 = vunpack.c.l.b16 %v1384
    %v1475 = vunpack.c.h.b16 %v1384
    %v1476 = vunpack.c.l.b16 %v1385
    %v1477 = vunpack.c.h.b16 %v1385
    %v1478 = vunpack.c.l.b16 %v1386
    %v1479 = vunpack.c.h.b16 %v1386
    %v1480 = vunpack.c.l.b16 %v1387
    %v1481 = vunpack.c.h.b16 %v1387
    %v1482 = vunpack.c.l.b16 %v1388
    %v1483 = vunpack.c.h.b16 %v1388
    %v1484 = vunpack.c.l.b16 %v1389
    %v1485 = vunpack.c.h.b16 %v1389
    %v1486 = vunpack.c.l.b16 %v1390
    %v1487 = vunpack.c.h.b16 %v1390
    %v1488 = vunpack.c.l.b16 %v1391
    %v1489 = vunpack.c.h.b16 %v1391
    %v1490 = vunpack.c.l.b16 %v1392
    %v1491 = vunpack.c.h.b16 %v1392
    %v1492 = vunpack.c.l.b16 %v1393
    %v1493 = vunpack.c.h.b16 %v1393
    %v1494 = vunpack.c.l.b16 %v1394
    %v1495 = vunpack.c.h.b16 %v1394
    %v1496 = vunpack.c.l.b16 %v1395
    %v1497 = vunpack.c.h.b16 %v1395
    %v1498 = vunpack.c.l.b16 %v1396
    %v1499 = vunpack.c.h.b16 %v1396
    %v1500 = vunpack.c.l.b16 %v1397
    %v1501 = vunpack.c.h.b16 %v1397
    %v1502 = vunpack.c.l.b16 %v1398
    %v1503 = vunpack.c.h.b16 %v1398
    %v1504 = vunpack.c.l.b16 %v1399
    %v1505 = vunpack.c.h.b16 %v1399
    %v1506 = vunpack.c.l.b16 %v1400
    %v1507 = vunpack.c.h.b16 %v1400
    %v1508 = vunpack.c.l.b16 %v1401
    %v1509 = vunpack.c.h.b16 %v1401
    %v1510 = vpack.c.b16 %v1448, %v1446
    %v1511 = vpack.c.b16 %v1449, %v1447
    %v1512 = vpack.c.b16 %v1452, %v1450
    %v1513 = vpack.c.b16 %v1453, %v1451
    %v1514 = vpack.c.b16 %v1456, %v1454
    %v1515 = vpack.c.b16 %v1457, %v1455
    %v1516 = vpack.c.b16 %v1460, %v1458
    %v1517 = vpack.c.b16 %v1461, %v1459
    %v1518 = vpack.c.b16 %v1464, %v1462
    %v1519 = vpack.c.b16 %v1465, %v1463
    %v1520 = vpack.c.b16 %v1468, %v1466
    %v1521 = vpack.c.b16 %v1469, %v1467
    %v1522 = vpack.c.b16 %v1472, %v1470
    %v1523 = vpack.c.b16 %v1473, %v1471
    %v1524 = vpack.c.b16 %v1476, %v1474
    %v1525 = vpack.c.b16 %v1477, %v1475
    %v1526 = vpack.c.b16 %v1480, %v1478
    %v1527 = vpack.c.b16 %v1481, %v1479
    %v1528 = vpack.c.b16 %v1484, %v1482
    %v1529 = vpack.c.b16 %v1485, %v1483
    %v1530 = vpack.c.b16 %v1488, %v1486
    %v1531 = vpack.c.b16 %v1489, %v1487
    %v1532 = vpack.c.b16 %v1492, %v1490
    %v1533 = vpack.c.b16 %v1493, %v1491
    %v1534 = vpack.c.b16 %v1496, %v1494
    %v1535 = vpack.c.b16 %v1497, %v1495
    %v1536 = vpack.c.b16 %v1500, %v1498
    %v1537 = vpack.c.b16 %v1501, %v1499
    %v1538 = vpack.c.b16 %v1504, %v1502
    %v1539 = vpack.c.b16 %v1505, %v1503
    %v1540 = vpack.c.b16 %v1508, %v1506
    %v1541 = vpack.c.b16 %v1509, %v1507
    %1574 = vmatprep.subr.bf16.mxu0 %v1511
    %1575 = vmatpush1.bf16.msra.mxu0 %v1510
    %1576 = vmatprep.subr.bf16.mxu0 %v1513
    %1577 = vmatpush1.bf16.msra.mxu0 %v1512
    %1578 = vmatprep.subr.bf16.mxu0 %v1515
    %1579 = vmatpush1.bf16.msra.mxu0 %v1514
    %1580 = vmatprep.subr.bf16.mxu0 %v1517
    %1581 = vmatpush1.bf16.msra.mxu0 %v1516
    %1582 = vmatprep.subr.bf16.mxu0 %v1519
    %1583 = vmatpush1.bf16.msra.mxu0 %v1518
    %1584 = vmatprep.subr.bf16.mxu0 %v1521
    %1585 = vmatpush1.bf16.msra.mxu0 %v1520
    %1586 = vmatprep.subr.bf16.mxu0 %v1523
    %1587 = vmatpush1.bf16.msra.mxu0 %v1522
    %1588 = vmatprep.subr.bf16.mxu0 %v1525
    %1589 = vmatpush1.bf16.msra.mxu0 %v1524
    %1590 = vmatprep.subr.bf16.mxu0 %v1527
    %1591 = vmatpush1.bf16.msra.mxu0 %v1526
    %1592 = vmatprep.subr.bf16.mxu0 %v1529
    %1593 = vmatpush1.bf16.msra.mxu0 %v1528
    %1594 = vmatprep.subr.bf16.mxu0 %v1531
    %1595 = vmatpush1.bf16.msra.mxu0 %v1530
    %1596 = vmatprep.subr.bf16.mxu0 %v1533
    %1597 = vmatpush1.bf16.msra.mxu0 %v1532
    %1598 = vmatprep.subr.bf16.mxu0 %v1535
    %1599 = vmatpush1.bf16.msra.mxu0 %v1534
    %1600 = vmatprep.subr.bf16.mxu0 %v1537
    %1601 = vmatpush1.bf16.msra.mxu0 %v1536
    %1602 = vmatprep.subr.bf16.mxu0 %v1539
    %1603 = vmatpush1.bf16.msra.mxu0 %v1538
    %1604 = vmatprep.subr.bf16.mxu0 %v1541
    %1605 = vmatpush1.bf16.msra.mxu0 %v1540
    %1606 = vmatprep.mubr.bf16.mxu0 %v1369
    %1607 = vmatmul.mubr.bf16.gmra.mrb[0].mxu0 %v1368
    %v1608 = vpop.f32.mrb[0].mxu0
    %v1609 = vadd.f32 %v1407, %v1608
    %v1610 = vpop.f32.mrb[0].mxu0
    %v1611 = vadd.f32 %v1411, %v1610
    %v1612 = vpop.f32.mrb[0].mxu0
    %v1613 = vpop.f32.mrb[0].mxu0
    %1614 = vdwg.mxu0
    %v1615 = vmax.f32 %v1609, 0.0
    %v1616 = vmax.f32 %v1611, 0.0
    %v1617 = vpack.c.bf16 %v1615, %v1615
    %v1618 = vpack.c.bf16 %v1616, %v1616
    %v1619 = vld [vmem:[#allocation19] sm:$0xf]
    %v1620 = vld [vmem:[#allocation19 + $0x4] sm:$0xf]
    %v1621 = vld [vmem:[#allocation19 + $0x8] sm:$0xf]
    %v1622 = vld [vmem:[#allocation19 + $0xc] sm:$0xf]
    %v1623 = vld [vmem:[#allocation19 + $0x10] sm:$0xf]
    %v1624 = vld [vmem:[#allocation19 + $0x14] sm:$0xf]
    %v1625 = vld [vmem:[#allocation19 + $0x18] sm:$0xf]
    %v1626 = vld [vmem:[#allocation19 + $0x1c] sm:$0xf]
    %v1627 = vld [vmem:[#allocation19 + $0x20] sm:$0xf]
    %v1628 = vld [vmem:[#allocation19 + $0x24] sm:$0xf]
    %v1629 = vld [vmem:[#allocation19 + $0x28] sm:$0xf]
    %v1630 = vld [vmem:[#allocation19 + $0x2c] sm:$0xf]
    %v1631 = vld [vmem:[#allocation19 + $0x30] sm:$0xf]
    %v1632 = vld [vmem:[#allocation19 + $0x34] sm:$0xf]
    %v1633 = vld [vmem:[#allocation19 + $0x38] sm:$0xf]
    %v1634 = vld [vmem:[#allocation19 + $0x3c] sm:$0xf]
    %v1635 = vld [vmem:[#allocation19 + $0x40] sm:$0xf]
    %v1636 = vld [vmem:[#allocation19 + $0x44] sm:$0xf]
    %v1637 = vld [vmem:[#allocation19 + $0x48] sm:$0xf]
    %v1638 = vld [vmem:[#allocation19 + $0x4c] sm:$0xf]
    %v1639 = vld [vmem:[#allocation19 + $0x50] sm:$0xf]
    %v1640 = vld [vmem:[#allocation19 + $0x54] sm:$0xf]
    %v1641 = vld [vmem:[#allocation19 + $0x58] sm:$0xf]
    %v1642 = vld [vmem:[#allocation19 + $0x5c] sm:$0xf]
    %v1643 = vld [vmem:[#allocation19 + $0x60] sm:$0xf]
    %v1644 = vld [vmem:[#allocation19 + $0x64] sm:$0xf]
    %v1645 = vld [vmem:[#allocation19 + $0x68] sm:$0xf]
    %v1646 = vld [vmem:[#allocation19 + $0x6c] sm:$0xf]
    %v1647 = vld [vmem:[#allocation19 + $0x70] sm:$0xf]
    %v1648 = vld [vmem:[#allocation19 + $0x74] sm:$0xf]
    %v1649 = vld [vmem:[#allocation19 + $0x78] sm:$0xf]
    %v1650 = vld [vmem:[#allocation19 + $0x7c] sm:$0xf]
    %v1651 = vld [vmem:[#allocation20] sm:$0x1]
    %v1653 = vlaneseq
    %v1654 = vshrl.u32 %v1653, 7
    %v1655 = vsub.s32 0, %v1654
    %v1656 = vrot.slane %v1651, %v1655
    %v1690 = vunpack.c.l.b16 %v1619
    %v1691 = vunpack.c.l.b16 %v1620
    %v1692 = vunpack.c.l.b16 %v1621
    %v1693 = vunpack.c.l.b16 %v1622
    %v1694 = vunpack.c.l.b16 %v1623
    %v1695 = vunpack.c.l.b16 %v1624
    %v1696 = vunpack.c.l.b16 %v1625
    %v1697 = vunpack.c.l.b16 %v1626
    %v1698 = vunpack.c.l.b16 %v1627
    %v1699 = vunpack.c.l.b16 %v1628
    %v1700 = vunpack.c.l.b16 %v1629
    %v1701 = vunpack.c.l.b16 %v1630
    %v1702 = vunpack.c.l.b16 %v1631
    %v1703 = vunpack.c.l.b16 %v1632
    %v1704 = vunpack.c.l.b16 %v1633
    %v1705 = vunpack.c.l.b16 %v1634
    %v1706 = vunpack.c.l.b16 %v1635
    %v1707 = vunpack.c.l.b16 %v1636
    %v1708 = vunpack.c.l.b16 %v1637
    %v1709 = vunpack.c.l.b16 %v1638
    %v1710 = vunpack.c.l.b16 %v1639
    %v1711 = vunpack.c.l.b16 %v1640
    %v1712 = vunpack.c.l.b16 %v1641
    %v1713 = vunpack.c.l.b16 %v1642
    %v1714 = vunpack.c.l.b16 %v1643
    %v1715 = vunpack.c.l.b16 %v1644
    %v1716 = vunpack.c.l.b16 %v1645
    %v1717 = vunpack.c.l.b16 %v1646
    %v1718 = vunpack.c.l.b16 %v1647
    %v1719 = vunpack.c.l.b16 %v1648
    %v1720 = vunpack.c.l.b16 %v1649
    %v1721 = vunpack.c.l.b16 %v1650
    %v1722 = vpack.c.b16 %v1691, %v1690
    %v1723 = vpack.c.b16 %v1693, %v1692
    %v1724 = vpack.c.b16 %v1695, %v1694
    %v1725 = vpack.c.b16 %v1697, %v1696
    %v1726 = vpack.c.b16 %v1699, %v1698
    %v1727 = vpack.c.b16 %v1701, %v1700
    %v1728 = vpack.c.b16 %v1703, %v1702
    %v1729 = vpack.c.b16 %v1705, %v1704
    %v1730 = vpack.c.b16 %v1707, %v1706
    %v1731 = vpack.c.b16 %v1709, %v1708
    %v1732 = vpack.c.b16 %v1711, %v1710
    %v1733 = vpack.c.b16 %v1713, %v1712
    %v1734 = vpack.c.b16 %v1715, %v1714
    %v1735 = vpack.c.b16 %v1717, %v1716
    %v1736 = vpack.c.b16 %v1719, %v1718
    %v1737 = vpack.c.b16 %v1721, %v1720
    %1754 = vmatprep.subr.bf16.mxu0 0
    %1755 = vmatpush1.bf16.msra.mxu0 %v1722
    %1756 = vmatprep.subr.bf16.mxu0 0
    %1757 = vmatpush1.bf16.msra.mxu0 %v1723
    %1758 = vmatprep.subr.bf16.mxu0 0
    %1759 = vmatpush1.bf16.msra.mxu0 %v1724
    %1760 = vmatprep.subr.bf16.mxu0 0
    %1761 = vmatpush1.bf16.msra.mxu0 %v1725
    %1762 = vmatprep.subr.bf16.mxu0 0
    %1763 = vmatpush1.bf16.msra.mxu0 %v1726
    %1764 = vmatprep.subr.bf16.mxu0 0
    %1765 = vmatpush1.bf16.msra.mxu0 %v1727
    %1766 = vmatprep.subr.bf16.mxu0 0
    %1767 = vmatpush1.bf16.msra.mxu0 %v1728
    %1768 = vmatprep.subr.bf16.mxu0 0
    %1769 = vmatpush1.bf16.msra.mxu0 %v1729
    %1770 = vmatprep.subr.bf16.mxu0 0
    %1771 = vmatpush1.bf16.msra.mxu0 %v1730
    %1772 = vmatprep.subr.bf16.mxu0 0
    %1773 = vmatpush1.bf16.msra.mxu0 %v1731
    %1774 = vmatprep.subr.bf16.mxu0 0
    %1775 = vmatpush1.bf16.msra.mxu0 %v1732
    %1776 = vmatprep.subr.bf16.mxu0 0
    %1777 = vmatpush1.bf16.msra.mxu0 %v1733
    %1778 = vmatprep.subr.bf16.mxu0 0
    %1779 = vmatpush1.bf16.msra.mxu0 %v1734
    %1780 = vmatprep.subr.bf16.mxu0 0
    %1781 = vmatpush1.bf16.msra.mxu0 %v1735
    %1782 = vmatprep.subr.bf16.mxu0 0
    %1783 = vmatpush1.bf16.msra.mxu0 %v1736
    %1784 = vmatprep.subr.bf16.mxu0 0
    %1785 = vmatpush1.bf16.msra.mxu0 %v1737
    %1786 = vmatprep.mubr.bf16.mxu0 %v1618
    %1787 = vmatmul.mubr.bf16.gmra.mrb[0].mxu0 %v1617
    %v1788 = vpop.f32.mrb[0].mxu0
    %v1789 = vadd.f32 %v1656, %v1788
    %v1790 = vpop.f32.mrb[0].mxu0
    %v1791 = vpop.f32.mrb[0].mxu0
    %v1792 = vpop.f32.mrb[0].mxu0
    %1793 = vdwg.mxu0
    %v1794 = vadd.f32 %v1114, %v1789
    %v1796 = vrot.slane %v1789, 2
    %v1798 = vadd.f32 %v1794, %v1796
    %v1799 = vrot.slane %v1789, 4
    %v1801 = vadd.f32 %v1798, %v1799
    %v1802 = vld [vmem:[%s14] sm:$0x3f]
    %v1803 = vld [vmem:[%s14 + $0x8] sm:$0x3f]
    %v1804 = vmax.f32 %v1802, 0.0
    %v1805 = vmax.f32 %v1803, 0.0
    %v1806 = vpack.c.bf16 %v1804, %v1804
    %v1807 = vpack.c.bf16 %v1805, %v1805
    %v1808 = vld [vmem:[#allocation22] sm:$0xff]
    %v1809 = vld [vmem:[#allocation22 + $0x8] sm:$0xff]
    %v1810 = vld [vmem:[#allocation22 + $0x10] sm:$0xff]
    %v1811 = vld [vmem:[#allocation22 + $0x18] sm:$0xff]
    %v1812 = vld [vmem:[#allocation22 + $0x20] sm:$0xff]
    %v1813 = vld [vmem:[#allocation22 + $0x28] sm:$0xff]
    %v1814 = vld [vmem:[#allocation22 + $0x30] sm:$0xff]
    %v1815 = vld [vmem:[#allocation22 + $0x38] sm:$0xff]
    %v1816 = vld [vmem:[#allocation22 + $0x40] sm:$0xff]
    %v1817 = vld [vmem:[#allocation22 + $0x48] sm:$0xff]
    %v1818 = vld [vmem:[#allocation22 + $0x50] sm:$0xff]
    %v1819 = vld [vmem:[#allocation22 + $0x58] sm:$0xff]
    %v1820 = vld [vmem:[#allocation22 + $0x60] sm:$0xff]
    %v1821 = vld [vmem:[#allocation22 + $0x68] sm:$0xff]
    %v1822 = vld [vmem:[#allocation22 + $0x70] sm:$0xff]
    %v1823 = vld [vmem:[#allocation22 + $0x78] sm:$0xff]
    %v1824 = vld [vmem:[#allocation22 + $0x80] sm:$0xff]
    %v1825 = vld [vmem:[#allocation22 + $0x88] sm:$0xff]
    %v1826 = vld [vmem:[#allocation22 + $0x90] sm:$0xff]
    %v1827 = vld [vmem:[#allocation22 + $0x98] sm:$0xff]
    %v1828 = vld [vmem:[#allocation22 + $0xa0] sm:$0xff]
    %v1829 = vld [vmem:[#allocation22 + $0xa8] sm:$0xff]
    %v1830 = vld [vmem:[#allocation22 + $0xb0] sm:$0xff]
    %v1831 = vld [vmem:[#allocation22 + $0xb8] sm:$0xff]
    %v1832 = vld [vmem:[%s16] sm:$0x3]
    %v1834 = vlaneseq
    %v1835 = vshrl.u32 %v1834, 7
    %v1836 = vsub.s32 0, %v1835
    %v1837 = vrot.slane %v1832, %v1836
    %v1838 = vlaneseq
    %v1839 = vshrl.u32 %v1838, 7
    %v1840 = vsub.s32 1, %v1839
    %v1841 = vrot.slane %v1832, %v1840
    %v1868 = vunpack.c.l.b16 %v1808
    %v1869 = vunpack.c.h.b16 %v1808
    %v1870 = vunpack.c.l.b16 %v1809
    %v1871 = vunpack.c.h.b16 %v1809
    %v1872 = vunpack.c.l.b16 %v1810
    %v1873 = vunpack.c.h.b16 %v1810
    %v1874 = vunpack.c.l.b16 %v1811
    %v1875 = vunpack.c.h.b16 %v1811
    %v1876 = vunpack.c.l.b16 %v1812
    %v1877 = vunpack.c.h.b16 %v1812
    %v1878 = vunpack.c.l.b16 %v1813
    %v1879 = vunpack.c.h.b16 %v1813
    %v1880 = vunpack.c.l.b16 %v1814
    %v1881 = vunpack.c.h.b16 %v1814
    %v1882 = vunpack.c.l.b16 %v1815
    %v1883 = vunpack.c.h.b16 %v1815
    %v1884 = vunpack.c.l.b16 %v1816
    %v1885 = vunpack.c.h.b16 %v1816
    %v1886 = vunpack.c.l.b16 %v1817
    %v1887 = vunpack.c.h.b16 %v1817
    %v1888 = vunpack.c.l.b16 %v1818
    %v1889 = vunpack.c.h.b16 %v1818
    %v1890 = vunpack.c.l.b16 %v1819
    %v1891 = vunpack.c.h.b16 %v1819
    %v1892 = vunpack.c.l.b16 %v1820
    %v1893 = vunpack.c.h.b16 %v1820
    %v1894 = vunpack.c.l.b16 %v1821
    %v1895 = vunpack.c.h.b16 %v1821
    %v1896 = vunpack.c.l.b16 %v1822
    %v1897 = vunpack.c.h.b16 %v1822
    %v1898 = vunpack.c.l.b16 %v1823
    %v1899 = vunpack.c.h.b16 %v1823
    %v1900 = vunpack.c.l.b16 %v1824
    %v1901 = vunpack.c.h.b16 %v1824
    %v1902 = vunpack.c.l.b16 %v1825
    %v1903 = vunpack.c.h.b16 %v1825
    %v1904 = vunpack.c.l.b16 %v1826
    %v1905 = vunpack.c.h.b16 %v1826
    %v1906 = vunpack.c.l.b16 %v1827
    %v1907 = vunpack.c.h.b16 %v1827
    %v1908 = vunpack.c.l.b16 %v1828
    %v1909 = vunpack.c.h.b16 %v1828
    %v1910 = vunpack.c.l.b16 %v1829
    %v1911 = vunpack.c.h.b16 %v1829
    %v1912 = vunpack.c.l.b16 %v1830
    %v1913 = vunpack.c.h.b16 %v1830
    %v1914 = vunpack.c.l.b16 %v1831
    %v1915 = vunpack.c.h.b16 %v1831
    %v1916 = vpack.c.b16 %v1870, %v1868
    %v1917 = vpack.c.b16 %v1871, %v1869
    %v1918 = vpack.c.b16 %v1874, %v1872
    %v1919 = vpack.c.b16 %v1875, %v1873
    %v1920 = vpack.c.b16 %v1878, %v1876
    %v1921 = vpack.c.b16 %v1879, %v1877
    %v1922 = vpack.c.b16 %v1882, %v1880
    %v1923 = vpack.c.b16 %v1883, %v1881
    %v1924 = vpack.c.b16 %v1886, %v1884
    %v1925 = vpack.c.b16 %v1887, %v1885
    %v1926 = vpack.c.b16 %v1890, %v1888
    %v1927 = vpack.c.b16 %v1891, %v1889
    %v1928 = vpack.c.b16 %v1894, %v1892
    %v1929 = vpack.c.b16 %v1895, %v1893
    %v1930 = vpack.c.b16 %v1898, %v1896
    %v1931 = vpack.c.b16 %v1899, %v1897
    %v1932 = vpack.c.b16 %v1902, %v1900
    %v1933 = vpack.c.b16 %v1903, %v1901
    %v1934 = vpack.c.b16 %v1906, %v1904
    %v1935 = vpack.c.b16 %v1907, %v1905
    %v1936 = vpack.c.b16 %v1910, %v1908
    %v1937 = vpack.c.b16 %v1911, %v1909
    %v1938 = vpack.c.b16 %v1914, %v1912
    %v1939 = vpack.c.b16 %v1915, %v1913
    %v1965 = vsel %vm600, %v1807, 0
    %1967 = vmatprep.subr.bf16.mxu0 %v1917
    %1968 = vmatpush1.bf16.msra.mxu0 %v1916
    %1969 = vmatprep.subr.bf16.mxu0 %v1919
    %1970 = vmatpush1.bf16.msra.mxu0 %v1918
    %1971 = vmatprep.subr.bf16.mxu0 %v1921
    %1972 = vmatpush1.bf16.msra.mxu0 %v1920
    %1973 = vmatprep.subr.bf16.mxu0 %v1923
    %1974 = vmatpush1.bf16.msra.mxu0 %v1922
    %1975 = vmatprep.subr.bf16.mxu0 %v1925
    %1976 = vmatpush1.bf16.msra.mxu0 %v1924
    %1977 = vmatprep.subr.bf16.mxu0 %v1927
    %1978 = vmatpush1.bf16.msra.mxu0 %v1926
    %1979 = vmatprep.subr.bf16.mxu0 %v1929
    %1980 = vmatpush1.bf16.msra.mxu0 %v1928
    %1981 = vmatprep.subr.bf16.mxu0 %v1931
    %1982 = vmatpush1.bf16.msra.mxu0 %v1930
    %1983 = vmatprep.subr.bf16.mxu0 %v1933
    %1984 = vmatpush1.bf16.msra.mxu0 %v1932
    %1985 = vmatprep.subr.bf16.mxu0 %v1935
    %1986 = vmatpush1.bf16.msra.mxu0 %v1934
    %1987 = vmatprep.subr.bf16.mxu0 %v1937
    %1988 = vmatpush1.bf16.msra.mxu0 %v1936
    %1989 = vmatprep.subr.bf16.mxu0 %v1939
    %1990 = vmatpush1.bf16.msra.mxu0 %v1938
    %1991 = vmatprep.subr.bf16.mxu0 0
    %1992 = vmatpush1.bf16.msra.mxu0 0
    %1993 = vmatprep.subr.bf16.mxu0 0
    %1994 = vmatpush1.bf16.msra.mxu0 0
    %1995 = vmatprep.subr.bf16.mxu0 0
    %1996 = vmatpush1.bf16.msra.mxu0 0
    %1997 = vmatprep.subr.bf16.mxu0 0
    %1998 = vmatpush1.bf16.msra.mxu0 0
    %1999 = vmatprep.mubr.bf16.mxu0 %v1965
    %2000 = vmatmul.mubr.bf16.gmra.mrb[0].mxu0 %v1806
    %v2001 = vpop.f32.mrb[0].mxu0
    %v2002 = vadd.f32 %v1837, %v2001
    %v2003 = vpop.f32.mrb[0].mxu0
    %v2004 = vadd.f32 %v1841, %v2003
    %v2005 = vpop.f32.mrb[0].mxu0
    %v2006 = vpop.f32.mrb[0].mxu0
    %2007 = vdwg.mxu0
    %v2008 = vmax.f32 %v2002, 0.0
    %v2009 = vmax.f32 %v2004, 0.0
    %v2010 = vpack.c.bf16 %v2008, %v2008
    %v2011 = vpack.c.bf16 %v2009, %v2009
    %v2012 = vld [vmem:[#allocation23] sm:$0xff]
    %v2013 = vld [vmem:[#allocation23 + $0x8] sm:$0xff]
    %v2014 = vld [vmem:[#allocation23 + $0x10] sm:$0xff]
    %v2015 = vld [vmem:[#allocation23 + $0x18] sm:$0xff]
    %v2016 = vld [vmem:[#allocation23 + $0x20] sm:$0xff]
    %v2017 = vld [vmem:[#allocation23 + $0x28] sm:$0xff]
    %v2018 = vld [vmem:[#allocation23 + $0x30] sm:$0xff]
    %v2019 = vld [vmem:[#allocation23 + $0x38] sm:$0xff]
    %v2020 = vld [vmem:[#allocation23 + $0x40] sm:$0xff]
    %v2021 = vld [vmem:[#allocation23 + $0x48] sm:$0xff]
    %v2022 = vld [vmem:[#allocation23 + $0x50] sm:$0xff]
    %v2023 = vld [vmem:[#allocation23 + $0x58] sm:$0xff]
    %v2024 = vld [vmem:[#allocation23 + $0x60] sm:$0xff]
    %v2025 = vld [vmem:[#allocation23 + $0x68] sm:$0xff]
    %v2026 = vld [vmem:[#allocation23 + $0x70] sm:$0xff]
    %v2027 = vld [vmem:[#allocation23 + $0x78] sm:$0xff]
    %v2028 = vld [vmem:[#allocation23 + $0x80] sm:$0xff]
    %v2029 = vld [vmem:[#allocation23 + $0x88] sm:$0xff]
    %v2030 = vld [vmem:[#allocation23 + $0x90] sm:$0xff]
    %v2031 = vld [vmem:[#allocation23 + $0x98] sm:$0xff]
    %v2032 = vld [vmem:[#allocation23 + $0xa0] sm:$0xff]
    %v2033 = vld [vmem:[#allocation23 + $0xa8] sm:$0xff]
    %v2034 = vld [vmem:[#allocation23 + $0xb0] sm:$0xff]
    %v2035 = vld [vmem:[#allocation23 + $0xb8] sm:$0xff]
    %v2036 = vld [vmem:[#allocation23 + $0xc0] sm:$0xff]
    %v2037 = vld [vmem:[#allocation23 + $0xc8] sm:$0xff]
    %v2038 = vld [vmem:[#allocation23 + $0xd0] sm:$0xff]
    %v2039 = vld [vmem:[#allocation23 + $0xd8] sm:$0xff]
    %v2040 = vld [vmem:[#allocation23 + $0xe0] sm:$0xff]
    %v2041 = vld [vmem:[#allocation23 + $0xe8] sm:$0xff]
    %v2042 = vld [vmem:[#allocation23 + $0xf0] sm:$0xff]
    %v2043 = vld [vmem:[#allocation23 + $0xf8] sm:$0xff]
    %v2044 = vld [vmem:[%s18] sm:$0x3]
    %v2046 = vlaneseq
    %v2047 = vshrl.u32 %v2046, 7
    %v2048 = vsub.s32 0, %v2047
    %v2049 = vrot.slane %v2044, %v2048
    %v2050 = vlaneseq
    %v2051 = vshrl.u32 %v2050, 7
    %v2052 = vsub.s32 1, %v2051
    %v2053 = vrot.slane %v2044, %v2052
    %v2088 = vunpack.c.l.b16 %v2012
    %v2089 = vunpack.c.h.b16 %v2012
    %v2090 = vunpack.c.l.b16 %v2013
    %v2091 = vunpack.c.h.b16 %v2013
    %v2092 = vunpack.c.l.b16 %v2014
    %v2093 = vunpack.c.h.b16 %v2014
    %v2094 = vunpack.c.l.b16 %v2015
    %v2095 = vunpack.c.h.b16 %v2015
    %v2096 = vunpack.c.l.b16 %v2016
    %v2097 = vunpack.c.h.b16 %v2016
    %v2098 = vunpack.c.l.b16 %v2017
    %v2099 = vunpack.c.h.b16 %v2017
    %v2100 = vunpack.c.l.b16 %v2018
    %v2101 = vunpack.c.h.b16 %v2018
    %v2102 = vunpack.c.l.b16 %v2019
    %v2103 = vunpack.c.h.b16 %v2019
    %v2104 = vunpack.c.l.b16 %v2020
    %v2105 = vunpack.c.h.b16 %v2020
    %v2106 = vunpack.c.l.b16 %v2021
    %v2107 = vunpack.c.h.b16 %v2021
    %v2108 = vunpack.c.l.b16 %v2022
    %v2109 = vunpack.c.h.b16 %v2022
    %v2110 = vunpack.c.l.b16 %v2023
    %v2111 = vunpack.c.h.b16 %v2023
    %v2112 = vunpack.c.l.b16 %v2024
    %v2113 = vunpack.c.h.b16 %v2024
    %v2114 = vunpack.c.l.b16 %v2025
    %v2115 = vunpack.c.h.b16 %v2025
    %v2116 = vunpack.c.l.b16 %v2026
    %v2117 = vunpack.c.h.b16 %v2026
    %v2118 = vunpack.c.l.b16 %v2027
    %v2119 = vunpack.c.h.b16 %v2027
    %v2120 = vunpack.c.l.b16 %v2028
    %v2121 = vunpack.c.h.b16 %v2028
    %v2122 = vunpack.c.l.b16 %v2029
    %v2123 = vunpack.c.h.b16 %v2029
    %v2124 = vunpack.c.l.b16 %v2030
    %v2125 = vunpack.c.h.b16 %v2030
    %v2126 = vunpack.c.l.b16 %v2031
    %v2127 = vunpack.c.h.b16 %v2031
    %v2128 = vunpack.c.l.b16 %v2032
    %v2129 = vunpack.c.h.b16 %v2032
    %v2130 = vunpack.c.l.b16 %v2033
    %v2131 = vunpack.c.h.b16 %v2033
    %v2132 = vunpack.c.l.b16 %v2034
    %v2133 = vunpack.c.h.b16 %v2034
    %v2134 = vunpack.c.l.b16 %v2035
    %v2135 = vunpack.c.h.b16 %v2035
    %v2136 = vunpack.c.l.b16 %v2036
    %v2137 = vunpack.c.h.b16 %v2036
    %v2138 = vunpack.c.l.b16 %v2037
    %v2139 = vunpack.c.h.b16 %v2037
    %v2140 = vunpack.c.l.b16 %v2038
    %v2141 = vunpack.c.h.b16 %v2038
    %v2142 = vunpack.c.l.b16 %v2039
    %v2143 = vunpack.c.h.b16 %v2039
    %v2144 = vunpack.c.l.b16 %v2040
    %v2145 = vunpack.c.h.b16 %v2040
    %v2146 = vunpack.c.l.b16 %v2041
    %v2147 = vunpack.c.h.b16 %v2041
    %v2148 = vunpack.c.l.b16 %v2042
    %v2149 = vunpack.c.h.b16 %v2042
    %v2150 = vunpack.c.l.b16 %v2043
    %v2151 = vunpack.c.h.b16 %v2043
    %v2152 = vpack.c.b16 %v2090, %v2088
    %v2153 = vpack.c.b16 %v2091, %v2089
    %v2154 = vpack.c.b16 %v2094, %v2092
    %v2155 = vpack.c.b16 %v2095, %v2093
    %v2156 = vpack.c.b16 %v2098, %v2096
    %v2157 = vpack.c.b16 %v2099, %v2097
    %v2158 = vpack.c.b16 %v2102, %v2100
    %v2159 = vpack.c.b16 %v2103, %v2101
    %v2160 = vpack.c.b16 %v2106, %v2104
    %v2161 = vpack.c.b16 %v2107, %v2105
    %v2162 = vpack.c.b16 %v2110, %v2108
    %v2163 = vpack.c.b16 %v2111, %v2109
    %v2164 = vpack.c.b16 %v2114, %v2112
    %v2165 = vpack.c.b16 %v2115, %v2113
    %v2166 = vpack.c.b16 %v2118, %v2116
    %v2167 = vpack.c.b16 %v2119, %v2117
    %v2168 = vpack.c.b16 %v2122, %v2120
    %v2169 = vpack.c.b16 %v2123, %v2121
    %v2170 = vpack.c.b16 %v2126, %v2124
    %v2171 = vpack.c.b16 %v2127, %v2125
    %v2172 = vpack.c.b16 %v2130, %v2128
    %v2173 = vpack.c.b16 %v2131, %v2129
    %v2174 = vpack.c.b16 %v2134, %v2132
    %v2175 = vpack.c.b16 %v2135, %v2133
    %v2176 = vpack.c.b16 %v2138, %v2136
    %v2177 = vpack.c.b16 %v2139, %v2137
    %v2178 = vpack.c.b16 %v2142, %v2140
    %v2179 = vpack.c.b16 %v2143, %v2141
    %v2180 = vpack.c.b16 %v2146, %v2144
    %v2181 = vpack.c.b16 %v2147, %v2145
    %v2182 = vpack.c.b16 %v2150, %v2148
    %v2183 = vpack.c.b16 %v2151, %v2149
    %2216 = vmatprep.subr.bf16.mxu0 %v2153
    %2217 = vmatpush1.bf16.msra.mxu0 %v2152
    %2218 = vmatprep.subr.bf16.mxu0 %v2155
    %2219 = vmatpush1.bf16.msra.mxu0 %v2154
    %2220 = vmatprep.subr.bf16.mxu0 %v2157
    %2221 = vmatpush1.bf16.msra.mxu0 %v2156
    %2222 = vmatprep.subr.bf16.mxu0 %v2159
    %2223 = vmatpush1.bf16.msra.mxu0 %v2158
    %2224 = vmatprep.subr.bf16.mxu0 %v2161
    %2225 = vmatpush1.bf16.msra.mxu0 %v2160
    %2226 = vmatprep.subr.bf16.mxu0 %v2163
    %2227 = vmatpush1.bf16.msra.mxu0 %v2162
    %2228 = vmatprep.subr.bf16.mxu0 %v2165
    %2229 = vmatpush1.bf16.msra.mxu0 %v2164
    %2230 = vmatprep.subr.bf16.mxu0 %v2167
    %2231 = vmatpush1.bf16.msra.mxu0 %v2166
    %2232 = vmatprep.subr.bf16.mxu0 %v2169
    %2233 = vmatpush1.bf16.msra.mxu0 %v2168
    %2234 = vmatprep.subr.bf16.mxu0 %v2171
    %2235 = vmatpush1.bf16.msra.mxu0 %v2170
    %2236 = vmatprep.subr.bf16.mxu0 %v2173
    %2237 = vmatpush1.bf16.msra.mxu0 %v2172
    %2238 = vmatprep.subr.bf16.mxu0 %v2175
    %2239 = vmatpush1.bf16.msra.mxu0 %v2174
    %2240 = vmatprep.subr.bf16.mxu0 %v2177
    %2241 = vmatpush1.bf16.msra.mxu0 %v2176
    %2242 = vmatprep.subr.bf16.mxu0 %v2179
    %2243 = vmatpush1.bf16.msra.mxu0 %v2178
    %2244 = vmatprep.subr.bf16.mxu0 %v2181
    %2245 = vmatpush1.bf16.msra.mxu0 %v2180
    %2246 = vmatprep.subr.bf16.mxu0 %v2183
    %2247 = vmatpush1.bf16.msra.mxu0 %v2182
    %2248 = vmatprep.mubr.bf16.mxu0 %v2011
    %2249 = vmatmul.mubr.bf16.gmra.mrb[0].mxu0 %v2010
    %v2250 = vpop.f32.mrb[0].mxu0
    %v2251 = vadd.f32 %v2049, %v2250
    %v2252 = vpop.f32.mrb[0].mxu0
    %v2253 = vadd.f32 %v2053, %v2252
    %v2254 = vpop.f32.mrb[0].mxu0
    %v2255 = vpop.f32.mrb[0].mxu0
    %2256 = vdwg.mxu0
    %v2257 = vmax.f32 %v2251, 0.0
    %v2258 = vmax.f32 %v2253, 0.0
    %v2259 = vpack.c.bf16 %v2257, %v2257
    %v2260 = vpack.c.bf16 %v2258, %v2258
    %v2261 = vld [vmem:[#allocation25] sm:$0xf]
    %v2262 = vld [vmem:[#allocation25 + $0x4] sm:$0xf]
    %v2263 = vld [vmem:[#allocation25 + $0x8] sm:$0xf]
    %v2264 = vld [vmem:[#allocation25 + $0xc] sm:$0xf]
    %v2265 = vld [vmem:[#allocation25 + $0x10] sm:$0xf]
    %v2266 = vld [vmem:[#allocation25 + $0x14] sm:$0xf]
    %v2267 = vld [vmem:[#allocation25 + $0x18] sm:$0xf]
    %v2268 = vld [vmem:[#allocation25 + $0x1c] sm:$0xf]
    %v2269 = vld [vmem:[#allocation25 + $0x20] sm:$0xf]
    %v2270 = vld [vmem:[#allocation25 + $0x24] sm:$0xf]
    %v2271 = vld [vmem:[#allocation25 + $0x28] sm:$0xf]
    %v2272 = vld [vmem:[#allocation25 + $0x2c] sm:$0xf]
    %v2273 = vld [vmem:[#allocation25 + $0x30] sm:$0xf]
    %v2274 = vld [vmem:[#allocation25 + $0x34] sm:$0xf]
    %v2275 = vld [vmem:[#allocation25 + $0x38] sm:$0xf]
    %v2276 = vld [vmem:[#allocation25 + $0x3c] sm:$0xf]
    %v2277 = vld [vmem:[#allocation25 + $0x40] sm:$0xf]
    %v2278 = vld [vmem:[#allocation25 + $0x44] sm:$0xf]
    %v2279 = vld [vmem:[#allocation25 + $0x48] sm:$0xf]
    %v2280 = vld [vmem:[#allocation25 + $0x4c] sm:$0xf]
    %v2281 = vld [vmem:[#allocation25 + $0x50] sm:$0xf]
    %v2282 = vld [vmem:[#allocation25 + $0x54] sm:$0xf]
    %v2283 = vld [vmem:[#allocation25 + $0x58] sm:$0xf]
    %v2284 = vld [vmem:[#allocation25 + $0x5c] sm:$0xf]
    %v2285 = vld [vmem:[#allocation25 + $0x60] sm:$0xf]
    %v2286 = vld [vmem:[#allocation25 + $0x64] sm:$0xf]
    %v2287 = vld [vmem:[#allocation25 + $0x68] sm:$0xf]
    %v2288 = vld [vmem:[#allocation25 + $0x6c] sm:$0xf]
    %v2289 = vld [vmem:[#allocation25 + $0x70] sm:$0xf]
    %v2290 = vld [vmem:[#allocation25 + $0x74] sm:$0xf]
    %v2291 = vld [vmem:[#allocation25 + $0x78] sm:$0xf]
    %v2292 = vld [vmem:[#allocation25 + $0x7c] sm:$0xf]
    %v2293 = vld [vmem:[%s20] sm:$0x1]
    %v2295 = vlaneseq
    %v2296 = vshrl.u32 %v2295, 7
    %v2297 = vsub.s32 0, %v2296
    %v2298 = vrot.slane %v2293, %v2297
    %v2332 = vunpack.c.l.b16 %v2261
    %v2333 = vunpack.c.l.b16 %v2262
    %v2334 = vunpack.c.l.b16 %v2263
    %v2335 = vunpack.c.l.b16 %v2264
    %v2336 = vunpack.c.l.b16 %v2265
    %v2337 = vunpack.c.l.b16 %v2266
    %v2338 = vunpack.c.l.b16 %v2267
    %v2339 = vunpack.c.l.b16 %v2268
    %v2340 = vunpack.c.l.b16 %v2269
    %v2341 = vunpack.c.l.b16 %v2270
    %v2342 = vunpack.c.l.b16 %v2271
    %v2343 = vunpack.c.l.b16 %v2272
    %v2344 = vunpack.c.l.b16 %v2273
    %v2345 = vunpack.c.l.b16 %v2274
    %v2346 = vunpack.c.l.b16 %v2275
    %v2347 = vunpack.c.l.b16 %v2276
    %v2348 = vunpack.c.l.b16 %v2277
    %v2349 = vunpack.c.l.b16 %v2278
    %v2350 = vunpack.c.l.b16 %v2279
    %v2351 = vunpack.c.l.b16 %v2280
    %v2352 = vunpack.c.l.b16 %v2281
    %v2353 = vunpack.c.l.b16 %v2282
    %v2354 = vunpack.c.l.b16 %v2283
    %v2355 = vunpack.c.l.b16 %v2284
    %v2356 = vunpack.c.l.b16 %v2285
    %v2357 = vunpack.c.l.b16 %v2286
    %v2358 = vunpack.c.l.b16 %v2287
    %v2359 = vunpack.c.l.b16 %v2288
    %v2360 = vunpack.c.l.b16 %v2289
    %v2361 = vunpack.c.l.b16 %v2290
    %v2362 = vunpack.c.l.b16 %v2291
    %v2363 = vunpack.c.l.b16 %v2292
    %v2364 = vpack.c.b16 %v2333, %v2332
    %v2365 = vpack.c.b16 %v2335, %v2334
    %v2366 = vpack.c.b16 %v2337, %v2336
    %v2367 = vpack.c.b16 %v2339, %v2338
    %v2368 = vpack.c.b16 %v2341, %v2340
    %v2369 = vpack.c.b16 %v2343, %v2342
    %v2370 = vpack.c.b16 %v2345, %v2344
    %v2371 = vpack.c.b16 %v2347, %v2346
    %v2372 = vpack.c.b16 %v2349, %v2348
    %v2373 = vpack.c.b16 %v2351, %v2350
    %v2374 = vpack.c.b16 %v2353, %v2352
    %v2375 = vpack.c.b16 %v2355, %v2354
    %v2376 = vpack.c.b16 %v2357, %v2356
    %v2377 = vpack.c.b16 %v2359, %v2358
    %v2378 = vpack.c.b16 %v2361, %v2360
    %v2379 = vpack.c.b16 %v2363, %v2362
    %2396 = vmatprep.subr.bf16.mxu0 0
    %2397 = vmatpush1.bf16.msra.mxu0 %v2364
    %2398 = vmatprep.subr.bf16.mxu0 0
    %2399 = vmatpush1.bf16.msra.mxu0 %v2365
    %2400 = vmatprep.subr.bf16.mxu0 0
    %2401 = vmatpush1.bf16.msra.mxu0 %v2366
    %2402 = vmatprep.subr.bf16.mxu0 0
    %2403 = vmatpush1.bf16.msra.mxu0 %v2367
    %2404 = vmatprep.subr.bf16.mxu0 0
    %2405 = vmatpush1.bf16.msra.mxu0 %v2368
    %2406 = vmatprep.subr.bf16.mxu0 0
    %2407 = vmatpush1.bf16.msra.mxu0 %v2369
    %2408 = vmatprep.subr.bf16.mxu0 0
    %2409 = vmatpush1.bf16.msra.mxu0 %v2370
    %2410 = vmatprep.subr.bf16.mxu0 0
    %2411 = vmatpush1.bf16.msra.mxu0 %v2371
    %2412 = vmatprep.subr.bf16.mxu0 0
    %2413 = vmatpush1.bf16.msra.mxu0 %v2372
    %2414 = vmatprep.subr.bf16.mxu0 0
    %2415 = vmatpush1.bf16.msra.mxu0 %v2373
    %2416 = vmatprep.subr.bf16.mxu0 0
    %2417 = vmatpush1.bf16.msra.mxu0 %v2374
    %2418 = vmatprep.subr.bf16.mxu0 0
    %2419 = vmatpush1.bf16.msra.mxu0 %v2375
    %2420 = vmatprep.subr.bf16.mxu0 0
    %2421 = vmatpush1.bf16.msra.mxu0 %v2376
    %2422 = vmatprep.subr.bf16.mxu0 0
    %2423 = vmatpush1.bf16.msra.mxu0 %v2377
    %2424 = vmatprep.subr.bf16.mxu0 0
    %2425 = vmatpush1.bf16.msra.mxu0 %v2378
    %2426 = vmatprep.subr.bf16.mxu0 0
    %2427 = vmatpush1.bf16.msra.mxu0 %v2379
    %2428 = vmatprep.mubr.bf16.mxu0 %v2260
    %2429 = vmatmul.mubr.bf16.gmra.mrb[0].mxu0 %v2259
    %v2430 = vpop.f32.mrb[0].mxu0
    %v2431 = vadd.f32 %v2298, %v2430
    %v2432 = vpop.f32.mrb[0].mxu0
    %v2433 = vpop.f32.mrb[0].mxu0
    %v2434 = vpop.f32.mrb[0].mxu0
    %2435 = vdwg.mxu0
    %v2436 = vadd.f32 %v1801, %v2431
    %v2438 = vrot.slane %v2431, 2
    %v2440 = vadd.f32 %v2436, %v2438
    %v2441 = vrot.slane %v2431, 4
    %v2443 = vadd.f32 %v2440, %v2441
    %v2444 = vld [vmem:[%s21] sm:$0x3f]
    %v2445 = vmax.f32 %v2444, 0.0
    %v2446 = vpack.c.bf16 %v2445, %v2445
    %v2447 = vld [vmem:[#allocation26] sm:$0xff]
    %v2448 = vld [vmem:[#allocation26 + $0x8] sm:$0xff]
    %v2449 = vld [vmem:[#allocation26 + $0x10] sm:$0xff]
    %v2450 = vld [vmem:[#allocation26 + $0x18] sm:$0xff]
    %v2451 = vld [vmem:[#allocation26 + $0x20] sm:$0xff]
    %v2452 = vld [vmem:[#allocation26 + $0x28] sm:$0xff]
    %v2453 = vld [vmem:[#allocation26 + $0x30] sm:$0xff]
    %v2454 = vld [vmem:[#allocation26 + $0x38] sm:$0xff]
    %v2455 = vld [vmem:[#allocation26 + $0x40] sm:$0xff]
    %v2456 = vld [vmem:[#allocation26 + $0x48] sm:$0xff]
    %v2457 = vld [vmem:[#allocation26 + $0x50] sm:$0xff]
    %v2458 = vld [vmem:[#allocation26 + $0x58] sm:$0xff]
    %v2459 = vld [vmem:[#allocation26 + $0x60] sm:$0xff]
    %v2460 = vld [vmem:[#allocation26 + $0x68] sm:$0xff]
    %v2461 = vld [vmem:[#allocation26 + $0x70] sm:$0xff]
    %v2462 = vld [vmem:[#allocation26 + $0x78] sm:$0xff]
    %v2463 = vld [vmem:[%s23] sm:$0x3]
    %v2465 = vlaneseq
    %v2466 = vshrl.u32 %v2465, 7
    %v2467 = vsub.s32 0, %v2466
    %v2468 = vrot.slane %v2463, %v2467
    %v2469 = vlaneseq
    %v2470 = vshrl.u32 %v2469, 7
    %v2471 = vsub.s32 1, %v2470
    %v2472 = vrot.slane %v2463, %v2471
    %v2491 = vunpack.c.l.b16 %v2447
    %v2492 = vunpack.c.h.b16 %v2447
    %v2493 = vunpack.c.l.b16 %v2448
    %v2494 = vunpack.c.h.b16 %v2448
    %v2495 = vunpack.c.l.b16 %v2449
    %v2496 = vunpack.c.h.b16 %v2449
    %v2497 = vunpack.c.l.b16 %v2450
    %v2498 = vunpack.c.h.b16 %v2450
    %v2499 = vunpack.c.l.b16 %v2451
    %v2500 = vunpack.c.h.b16 %v2451
    %v2501 = vunpack.c.l.b16 %v2452
    %v2502 = vunpack.c.h.b16 %v2452
    %v2503 = vunpack.c.l.b16 %v2453
    %v2504 = vunpack.c.h.b16 %v2453
    %v2505 = vunpack.c.l.b16 %v2454
    %v2506 = vunpack.c.h.b16 %v2454
    %v2507 = vunpack.c.l.b16 %v2455
    %v2508 = vunpack.c.h.b16 %v2455
    %v2509 = vunpack.c.l.b16 %v2456
    %v2510 = vunpack.c.h.b16 %v2456
    %v2511 = vunpack.c.l.b16 %v2457
    %v2512 = vunpack.c.h.b16 %v2457
    %v2513 = vunpack.c.l.b16 %v2458
    %v2514 = vunpack.c.h.b16 %v2458
    %v2515 = vunpack.c.l.b16 %v2459
    %v2516 = vunpack.c.h.b16 %v2459
    %v2517 = vunpack.c.l.b16 %v2460
    %v2518 = vunpack.c.h.b16 %v2460
    %v2519 = vunpack.c.l.b16 %v2461
    %v2520 = vunpack.c.h.b16 %v2461
    %v2521 = vunpack.c.l.b16 %v2462
    %v2522 = vunpack.c.h.b16 %v2462
    %v2523 = vpack.c.b16 %v2493, %v2491
    %v2524 = vpack.c.b16 %v2494, %v2492
    %v2525 = vpack.c.b16 %v2497, %v2495
    %v2526 = vpack.c.b16 %v2498, %v2496
    %v2527 = vpack.c.b16 %v2501, %v2499
    %v2528 = vpack.c.b16 %v2502, %v2500
    %v2529 = vpack.c.b16 %v2505, %v2503
    %v2530 = vpack.c.b16 %v2506, %v2504
    %v2531 = vpack.c.b16 %v2509, %v2507
    %v2532 = vpack.c.b16 %v2510, %v2508
    %v2533 = vpack.c.b16 %v2513, %v2511
    %v2534 = vpack.c.b16 %v2514, %v2512
    %v2535 = vpack.c.b16 %v2517, %v2515
    %v2536 = vpack.c.b16 %v2518, %v2516
    %v2537 = vpack.c.b16 %v2521, %v2519
    %v2538 = vpack.c.b16 %v2522, %v2520
    %2555 = vmatprep.subr.bf16.mxu0 %v2524
    %2556 = vmatpush1.bf16.msra.mxu0 %v2523
    %2557 = vmatprep.subr.bf16.mxu0 %v2526
    %2558 = vmatpush1.bf16.msra.mxu0 %v2525
    %2559 = vmatprep.subr.bf16.mxu0 %v2528
    %2560 = vmatpush1.bf16.msra.mxu0 %v2527
    %2561 = vmatprep.subr.bf16.mxu0 %v2530
    %2562 = vmatpush1.bf16.msra.mxu0 %v2529
    %2563 = vmatprep.subr.bf16.mxu0 %v2532
    %2564 = vmatpush1.bf16.msra.mxu0 %v2531
    %2565 = vmatprep.subr.bf16.mxu0 %v2534
    %2566 = vmatpush1.bf16.msra.mxu0 %v2533
    %2567 = vmatprep.subr.bf16.mxu0 %v2536
    %2568 = vmatpush1.bf16.msra.mxu0 %v2535
    %2569 = vmatprep.subr.bf16.mxu0 %v2538
    %2570 = vmatpush1.bf16.msra.mxu0 %v2537
    %2571 = vmatprep.subr.bf16.mxu0 0
    %2572 = vmatpush1.bf16.msra.mxu0 0
    %2573 = vmatprep.subr.bf16.mxu0 0
    %2574 = vmatpush1.bf16.msra.mxu0 0
    %2575 = vmatprep.subr.bf16.mxu0 0
    %2576 = vmatpush1.bf16.msra.mxu0 0
    %2577 = vmatprep.subr.bf16.mxu0 0
    %2578 = vmatpush1.bf16.msra.mxu0 0
    %2579 = vmatprep.subr.bf16.mxu0 0
    %2580 = vmatpush1.bf16.msra.mxu0 0
    %2581 = vmatprep.subr.bf16.mxu0 0
    %2582 = vmatpush1.bf16.msra.mxu0 0
    %2583 = vmatprep.subr.bf16.mxu0 0
    %2584 = vmatpush1.bf16.msra.mxu0 0
    %2585 = vmatprep.subr.bf16.mxu0 0
    %2586 = vmatpush1.bf16.msra.mxu0 0
    %2587 = vmatprep.mubr.bf16.mxu0 0
    %2588 = vmatmul.mubr.bf16.gmra.mrb[0].mxu0 %v2446
    %v2589 = vpop.f32.mrb[0].mxu0
    %v2590 = vadd.f32 %v2468, %v2589
    %v2591 = vpop.f32.mrb[0].mxu0
    %v2592 = vadd.f32 %v2472, %v2591
    %v2593 = vpop.f32.mrb[0].mxu0
    %v2594 = vpop.f32.mrb[0].mxu0
    %2595 = vdwg.mxu0
    %v2596 = vmax.f32 %v2590, 0.0
    %v2597 = vmax.f32 %v2592, 0.0
    %v2598 = vpack.c.bf16 %v2596, %v2596
    %v2599 = vpack.c.bf16 %v2597, %v2597
    %v2600 = vld [vmem:[#allocation28] sm:$0xff]
    %v2601 = vld [vmem:[#allocation28 + $0x8] sm:$0xff]
    %v2602 = vld [vmem:[#allocation28 + $0x10] sm:$0xff]
    %v2603 = vld [vmem:[#allocation28 + $0x18] sm:$0xff]
    %v2604 = vld [vmem:[#allocation28 + $0x20] sm:$0xff]
    %v2605 = vld [vmem:[#allocation28 + $0x28] sm:$0xff]
    %v2606 = vld [vmem:[#allocation28 + $0x30] sm:$0xff]
    %v2607 = vld [vmem:[#allocation28 + $0x38] sm:$0xff]
    %v2608 = vld [vmem:[#allocation28 + $0x40] sm:$0xff]
    %v2609 = vld [vmem:[#allocation28 + $0x48] sm:$0xff]
    %v2610 = vld [vmem:[#allocation28 + $0x50] sm:$0xff]
    %v2611 = vld [vmem:[#allocation28 + $0x58] sm:$0xff]
    %v2612 = vld [vmem:[#allocation28 + $0x60] sm:$0xff]
    %v2613 = vld [vmem:[#allocation28 + $0x68] sm:$0xff]
    %v2614 = vld [vmem:[#allocation28 + $0x70] sm:$0xff]
    %v2615 = vld [vmem:[#allocation28 + $0x78] sm:$0xff]
    %v2616 = vld [vmem:[#allocation28 + $0x80] sm:$0xff]
    %v2617 = vld [vmem:[#allocation28 + $0x88] sm:$0xff]
    %v2618 = vld [vmem:[#allocation28 + $0x90] sm:$0xff]
    %v2619 = vld [vmem:[#allocation28 + $0x98] sm:$0xff]
    %v2620 = vld [vmem:[#allocation28 + $0xa0] sm:$0xff]
    %v2621 = vld [vmem:[#allocation28 + $0xa8] sm:$0xff]
    %v2622 = vld [vmem:[#allocation28 + $0xb0] sm:$0xff]
    %v2623 = vld [vmem:[#allocation28 + $0xb8] sm:$0xff]
    %v2624 = vld [vmem:[#allocation28 + $0xc0] sm:$0xff]
    %v2625 = vld [vmem:[#allocation28 + $0xc8] sm:$0xff]
    %v2626 = vld [vmem:[#allocation28 + $0xd0] sm:$0xff]
    %v2627 = vld [vmem:[#allocation28 + $0xd8] sm:$0xff]
    %v2628 = vld [vmem:[#allocation28 + $0xe0] sm:$0xff]
    %v2629 = vld [vmem:[#allocation28 + $0xe8] sm:$0xff]
    %v2630 = vld [vmem:[#allocation28 + $0xf0] sm:$0xff]
    %v2631 = vld [vmem:[#allocation28 + $0xf8] sm:$0xff]
    %v2632 = vld [vmem:[%s25] sm:$0x3]
    %v2634 = vlaneseq
    %v2635 = vshrl.u32 %v2634, 7
    %v2636 = vsub.s32 0, %v2635
    %v2637 = vrot.slane %v2632, %v2636
    %v2638 = vlaneseq
    %v2639 = vshrl.u32 %v2638, 7
    %v2640 = vsub.s32 1, %v2639
    %v2641 = vrot.slane %v2632, %v2640
    %v2676 = vunpack.c.l.b16 %v2600
    %v2677 = vunpack.c.h.b16 %v2600
    %v2678 = vunpack.c.l.b16 %v2601
    %v2679 = vunpack.c.h.b16 %v2601
    %v2680 = vunpack.c.l.b16 %v2602
    %v2681 = vunpack.c.h.b16 %v2602
    %v2682 = vunpack.c.l.b16 %v2603
    %v2683 = vunpack.c.h.b16 %v2603
    %v2684 = vunpack.c.l.b16 %v2604
    %v2685 = vunpack.c.h.b16 %v2604
    %v2686 = vunpack.c.l.b16 %v2605
    %v2687 = vunpack.c.h.b16 %v2605
    %v2688 = vunpack.c.l.b16 %v2606
    %v2689 = vunpack.c.h.b16 %v2606
    %v2690 = vunpack.c.l.b16 %v2607
    %v2691 = vunpack.c.h.b16 %v2607
    %v2692 = vunpack.c.l.b16 %v2608
    %v2693 = vunpack.c.h.b16 %v2608
    %v2694 = vunpack.c.l.b16 %v2609
    %v2695 = vunpack.c.h.b16 %v2609
    %v2696 = vunpack.c.l.b16 %v2610
    %v2697 = vunpack.c.h.b16 %v2610
    %v2698 = vunpack.c.l.b16 %v2611
    %v2699 = vunpack.c.h.b16 %v2611
    %v2700 = vunpack.c.l.b16 %v2612
    %v2701 = vunpack.c.h.b16 %v2612
    %v2702 = vunpack.c.l.b16 %v2613
    %v2703 = vunpack.c.h.b16 %v2613
    %v2704 = vunpack.c.l.b16 %v2614
    %v2705 = vunpack.c.h.b16 %v2614
    %v2706 = vunpack.c.l.b16 %v2615
    %v2707 = vunpack.c.h.b16 %v2615
    %v2708 = vunpack.c.l.b16 %v2616
    %v2709 = vunpack.c.h.b16 %v2616
    %v2710 = vunpack.c.l.b16 %v2617
    %v2711 = vunpack.c.h.b16 %v2617
    %v2712 = vunpack.c.l.b16 %v2618
    %v2713 = vunpack.c.h.b16 %v2618
    %v2714 = vunpack.c.l.b16 %v2619
    %v2715 = vunpack.c.h.b16 %v2619
    %v2716 = vunpack.c.l.b16 %v2620
    %v2717 = vunpack.c.h.b16 %v2620
    %v2718 = vunpack.c.l.b16 %v2621
    %v2719 = vunpack.c.h.b16 %v2621
    %v2720 = vunpack.c.l.b16 %v2622
    %v2721 = vunpack.c.h.b16 %v2622
    %v2722 = vunpack.c.l.b16 %v2623
    %v2723 = vunpack.c.h.b16 %v2623
    %v2724 = vunpack.c.l.b16 %v2624
    %v2725 = vunpack.c.h.b16 %v2624
    %v2726 = vunpack.c.l.b16 %v2625
    %v2727 = vunpack.c.h.b16 %v2625
    %v2728 = vunpack.c.l.b16 %v2626
    %v2729 = vunpack.c.h.b16 %v2626
    %v2730 = vunpack.c.l.b16 %v2627
    %v2731 = vunpack.c.h.b16 %v2627
    %v2732 = vunpack.c.l.b16 %v2628
    %v2733 = vunpack.c.h.b16 %v2628
    %v2734 = vunpack.c.l.b16 %v2629
    %v2735 = vunpack.c.h.b16 %v2629
    %v2736 = vunpack.c.l.b16 %v2630
    %v2737 = vunpack.c.h.b16 %v2630
    %v2738 = vunpack.c.l.b16 %v2631
    %v2739 = vunpack.c.h.b16 %v2631
    %v2740 = vpack.c.b16 %v2678, %v2676
    %v2741 = vpack.c.b16 %v2679, %v2677
    %v2742 = vpack.c.b16 %v2682, %v2680
    %v2743 = vpack.c.b16 %v2683, %v2681
    %v2744 = vpack.c.b16 %v2686, %v2684
    %v2745 = vpack.c.b16 %v2687, %v2685
    %v2746 = vpack.c.b16 %v2690, %v2688
    %v2747 = vpack.c.b16 %v2691, %v2689
    %v2748 = vpack.c.b16 %v2694, %v2692
    %v2749 = vpack.c.b16 %v2695, %v2693
    %v2750 = vpack.c.b16 %v2698, %v2696
    %v2751 = vpack.c.b16 %v2699, %v2697
    %v2752 = vpack.c.b16 %v2702, %v2700
    %v2753 = vpack.c.b16 %v2703, %v2701
    %v2754 = vpack.c.b16 %v2706, %v2704
    %v2755 = vpack.c.b16 %v2707, %v2705
    %v2756 = vpack.c.b16 %v2710, %v2708
    %v2757 = vpack.c.b16 %v2711, %v2709
    %v2758 = vpack.c.b16 %v2714, %v2712
    %v2759 = vpack.c.b16 %v2715, %v2713
    %v2760 = vpack.c.b16 %v2718, %v2716
    %v2761 = vpack.c.b16 %v2719, %v2717
    %v2762 = vpack.c.b16 %v2722, %v2720
    %v2763 = vpack.c.b16 %v2723, %v2721
    %v2764 = vpack.c.b16 %v2726, %v2724
    %v2765 = vpack.c.b16 %v2727, %v2725
    %v2766 = vpack.c.b16 %v2730, %v2728
    %v2767 = vpack.c.b16 %v2731, %v2729
    %v2768 = vpack.c.b16 %v2734, %v2732
    %v2769 = vpack.c.b16 %v2735, %v2733
    %v2770 = vpack.c.b16 %v2738, %v2736
    %v2771 = vpack.c.b16 %v2739, %v2737
    %2804 = vmatprep.subr.bf16.mxu0 %v2741
    %2805 = vmatpush1.bf16.msra.mxu0 %v2740
    %2806 = vmatprep.subr.bf16.mxu0 %v2743
    %2807 = vmatpush1.bf16.msra.mxu0 %v2742
    %2808 = vmatprep.subr.bf16.mxu0 %v2745
    %2809 = vmatpush1.bf16.msra.mxu0 %v2744
    %2810 = vmatprep.subr.bf16.mxu0 %v2747
    %2811 = vmatpush1.bf16.msra.mxu0 %v2746
    %2812 = vmatprep.subr.bf16.mxu0 %v2749
    %2813 = vmatpush1.bf16.msra.mxu0 %v2748
    %2814 = vmatprep.subr.bf16.mxu0 %v2751
    %2815 = vmatpush1.bf16.msra.mxu0 %v2750
    %2816 = vmatprep.subr.bf16.mxu0 %v2753
    %2817 = vmatpush1.bf16.msra.mxu0 %v2752
    %2818 = vmatprep.subr.bf16.mxu0 %v2755
    %2819 = vmatpush1.bf16.msra.mxu0 %v2754
    %2820 = vmatprep.subr.bf16.mxu0 %v2757
    %2821 = vmatpush1.bf16.msra.mxu0 %v2756
    %2822 = vmatprep.subr.bf16.mxu0 %v2759
    %2823 = vmatpush1.bf16.msra.mxu0 %v2758
    %2824 = vmatprep.subr.bf16.mxu0 %v2761
    %2825 = vmatpush1.bf16.msra.mxu0 %v2760
    %2826 = vmatprep.subr.bf16.mxu0 %v2763
    %2827 = vmatpush1.bf16.msra.mxu0 %v2762
    %2828 = vmatprep.subr.bf16.mxu0 %v2765
    %2829 = vmatpush1.bf16.msra.mxu0 %v2764
    %2830 = vmatprep.subr.bf16.mxu0 %v2767
    %2831 = vmatpush1.bf16.msra.mxu0 %v2766
    %2832 = vmatprep.subr.bf16.mxu0 %v2769
    %2833 = vmatpush1.bf16.msra.mxu0 %v2768
    %2834 = vmatprep.subr.bf16.mxu0 %v2771
    %2835 = vmatpush1.bf16.msra.mxu0 %v2770
    %2836 = vmatprep.mubr.bf16.mxu0 %v2599
    %2837 = vmatmul.mubr.bf16.gmra.mrb[0].mxu0 %v2598
    %v2838 = vpop.f32.mrb[0].mxu0
    %v2839 = vadd.f32 %v2637, %v2838
    %v2840 = vpop.f32.mrb[0].mxu0
    %v2841 = vadd.f32 %v2641, %v2840
    %v2842 = vpop.f32.mrb[0].mxu0
    %v2843 = vpop.f32.mrb[0].mxu0
    %2844 = vdwg.mxu0
    %v2845 = vmax.f32 %v2839, 0.0
    %v2846 = vmax.f32 %v2841, 0.0
    %v2847 = vpack.c.bf16 %v2845, %v2845
    %v2848 = vpack.c.bf16 %v2846, %v2846
    %v2849 = vld [vmem:[#allocation29] sm:$0xf]
    %v2850 = vld [vmem:[#allocation29 + $0x4] sm:$0xf]
    %v2851 = vld [vmem:[#allocation29 + $0x8] sm:$0xf]
    %v2852 = vld [vmem:[#allocation29 + $0xc] sm:$0xf]
    %v2853 = vld [vmem:[#allocation29 + $0x10] sm:$0xf]
    %v2854 = vld [vmem:[#allocation29 + $0x14] sm:$0xf]
    %v2855 = vld [vmem:[#allocation29 + $0x18] sm:$0xf]
    %v2856 = vld [vmem:[#allocation29 + $0x1c] sm:$0xf]
    %v2857 = vld [vmem:[#allocation29 + $0x20] sm:$0xf]
    %v2858 = vld [vmem:[#allocation29 + $0x24] sm:$0xf]
    %v2859 = vld [vmem:[#allocation29 + $0x28] sm:$0xf]
    %v2860 = vld [vmem:[#allocation29 + $0x2c] sm:$0xf]
    %v2861 = vld [vmem:[#allocation29 + $0x30] sm:$0xf]
    %v2862 = vld [vmem:[#allocation29 + $0x34] sm:$0xf]
    %v2863 = vld [vmem:[#allocation29 + $0x38] sm:$0xf]
    %v2864 = vld [vmem:[#allocation29 + $0x3c] sm:$0xf]
    %v2865 = vld [vmem:[#allocation29 + $0x40] sm:$0xf]
    %v2866 = vld [vmem:[#allocation29 + $0x44] sm:$0xf]
    %v2867 = vld [vmem:[#allocation29 + $0x48] sm:$0xf]
    %v2868 = vld [vmem:[#allocation29 + $0x4c] sm:$0xf]
    %v2869 = vld [vmem:[#allocation29 + $0x50] sm:$0xf]
    %v2870 = vld [vmem:[#allocation29 + $0x54] sm:$0xf]
    %v2871 = vld [vmem:[#allocation29 + $0x58] sm:$0xf]
    %v2872 = vld [vmem:[#allocation29 + $0x5c] sm:$0xf]
    %v2873 = vld [vmem:[#allocation29 + $0x60] sm:$0xf]
    %v2874 = vld [vmem:[#allocation29 + $0x64] sm:$0xf]
    %v2875 = vld [vmem:[#allocation29 + $0x68] sm:$0xf]
    %v2876 = vld [vmem:[#allocation29 + $0x6c] sm:$0xf]
    %v2877 = vld [vmem:[#allocation29 + $0x70] sm:$0xf]
    %v2878 = vld [vmem:[#allocation29 + $0x74] sm:$0xf]
    %v2879 = vld [vmem:[#allocation29 + $0x78] sm:$0xf]
    %v2880 = vld [vmem:[#allocation29 + $0x7c] sm:$0xf]
    %v2881 = vld [vmem:[%s27] sm:$0x1]
    %v2883 = vlaneseq
    %v2884 = vshrl.u32 %v2883, 7
    %v2885 = vsub.s32 0, %v2884
    %v2886 = vrot.slane %v2881, %v2885
    %v2920 = vunpack.c.l.b16 %v2849
    %v2921 = vunpack.c.l.b16 %v2850
    %v2922 = vunpack.c.l.b16 %v2851
    %v2923 = vunpack.c.l.b16 %v2852
    %v2924 = vunpack.c.l.b16 %v2853
    %v2925 = vunpack.c.l.b16 %v2854
    %v2926 = vunpack.c.l.b16 %v2855
    %v2927 = vunpack.c.l.b16 %v2856
    %v2928 = vunpack.c.l.b16 %v2857
    %v2929 = vunpack.c.l.b16 %v2858
    %v2930 = vunpack.c.l.b16 %v2859
    %v2931 = vunpack.c.l.b16 %v2860
    %v2932 = vunpack.c.l.b16 %v2861
    %v2933 = vunpack.c.l.b16 %v2862
    %v2934 = vunpack.c.l.b16 %v2863
    %v2935 = vunpack.c.l.b16 %v2864
    %v2936 = vunpack.c.l.b16 %v2865
    %v2937 = vunpack.c.l.b16 %v2866
    %v2938 = vunpack.c.l.b16 %v2867
    %v2939 = vunpack.c.l.b16 %v2868
    %v2940 = vunpack.c.l.b16 %v2869
    %v2941 = vunpack.c.l.b16 %v2870
    %v2942 = vunpack.c.l.b16 %v2871
    %v2943 = vunpack.c.l.b16 %v2872
    %v2944 = vunpack.c.l.b16 %v2873
    %v2945 = vunpack.c.l.b16 %v2874
    %v2946 = vunpack.c.l.b16 %v2875
    %v2947 = vunpack.c.l.b16 %v2876
    %v2948 = vunpack.c.l.b16 %v2877
    %v2949 = vunpack.c.l.b16 %v2878
    %v2950 = vunpack.c.l.b16 %v2879
    %v2951 = vunpack.c.l.b16 %v2880
    %v2952 = vpack.c.b16 %v2921, %v2920
    %v2953 = vpack.c.b16 %v2923, %v2922
    %v2954 = vpack.c.b16 %v2925, %v2924
    %v2955 = vpack.c.b16 %v2927, %v2926
    %v2956 = vpack.c.b16 %v2929, %v2928
    %v2957 = vpack.c.b16 %v2931, %v2930
    %v2958 = vpack.c.b16 %v2933, %v2932
    %v2959 = vpack.c.b16 %v2935, %v2934
    %v2960 = vpack.c.b16 %v2937, %v2936
    %v2961 = vpack.c.b16 %v2939, %v2938
    %v2962 = vpack.c.b16 %v2941, %v2940
    %v2963 = vpack.c.b16 %v2943, %v2942
    %v2964 = vpack.c.b16 %v2945, %v2944
    %v2965 = vpack.c.b16 %v2947, %v2946
    %v2966 = vpack.c.b16 %v2949, %v2948
    %v2967 = vpack.c.b16 %v2951, %v2950
    %2984 = vmatprep.subr.bf16.mxu0 0
    %2985 = vmatpush1.bf16.msra.mxu0 %v2952
    %2986 = vmatprep.subr.bf16.mxu0 0
    %2987 = vmatpush1.bf16.msra.mxu0 %v2953
    %2988 = vmatprep.subr.bf16.mxu0 0
    %2989 = vmatpush1.bf16.msra.mxu0 %v2954
    %2990 = vmatprep.subr.bf16.mxu0 0
    %2991 = vmatpush1.bf16.msra.mxu0 %v2955
    %2992 = vmatprep.subr.bf16.mxu0 0
    %2993 = vmatpush1.bf16.msra.mxu0 %v2956
    %2994 = vmatprep.subr.bf16.mxu0 0
    %2995 = vmatpush1.bf16.msra.mxu0 %v2957
    %2996 = vmatprep.subr.bf16.mxu0 0
    %2997 = vmatpush1.bf16.msra.mxu0 %v2958
    %2998 = vmatprep.subr.bf16.mxu0 0
    %2999 = vmatpush1.bf16.msra.mxu0 %v2959
    %3000 = vmatprep.subr.bf16.mxu0 0
    %3001 = vmatpush1.bf16.msra.mxu0 %v2960
    %3002 = vmatprep.subr.bf16.mxu0 0
    %3003 = vmatpush1.bf16.msra.mxu0 %v2961
    %3004 = vmatprep.subr.bf16.mxu0 0
    %3005 = vmatpush1.bf16.msra.mxu0 %v2962
    %3006 = vmatprep.subr.bf16.mxu0 0
    %3007 = vmatpush1.bf16.msra.mxu0 %v2963
    %3008 = vmatprep.subr.bf16.mxu0 0
    %3009 = vmatpush1.bf16.msra.mxu0 %v2964
    %3010 = vmatprep.subr.bf16.mxu0 0
    %3011 = vmatpush1.bf16.msra.mxu0 %v2965
    %3012 = vmatprep.subr.bf16.mxu0 0
    %3013 = vmatpush1.bf16.msra.mxu0 %v2966
    %3014 = vmatprep.subr.bf16.mxu0 0
    %3015 = vmatpush1.bf16.msra.mxu0 %v2967
    %3016 = vmatprep.mubr.bf16.mxu0 %v2848
    %3017 = vmatmul.mubr.bf16.gmra.mrb[0].mxu0 %v2847
    %v3018 = vpop.f32.mrb[0].mxu0
    %v3019 = vadd.f32 %v2886, %v3018
    %v3020 = vpop.f32.mrb[0].mxu0
    %v3021 = vpop.f32.mrb[0].mxu0
    %v3022 = vpop.f32.mrb[0].mxu0
    %3023 = vdwg.mxu0
    %v3024 = vadd.f32 %v2443, %v3019
    %v3026 = vrot.slane %v3019, 2
    %v3028 = vadd.f32 %v3024, %v3026
    %v3029 = vrot.slane %v3019, 4
    %v3031 = vadd.f32 %v3028, %v3029
    %3032 = vst [vmem:[#allocation31] sm:$0x3] %v3031
    // Predicated region
    $region186: #{tpu_custom_call.1} parent=1 // pred_check
      _
    $region187: #{tpu_custom_call.1} parent=1 // pred_check_branch
      %3034 = sbr.rel (0) target = $region189
    $region188: #{tpu_custom_call.1} parent=1 // pred_region
      %s3036 = ssub.s32 32, 32
      %3037 = vsyncadd [#allocation4], %s3036
      %s3039 = sshll.u32 [#allocation31], 4
      %s3040 = int_to_ptr.vmem [resolvable:$true] %s3039
      %3042 = dma.vmem_to_hbm [thread:$0]  %s3040, 32, %s28, [#allocation4]
    $region189: #{tpu_custom_call.1} parent=1 // pred_fallthru
      _
    // Predicated region
    $region190: #{tpu_custom_call.1} parent=1 // pred_check
      _
    $region191: #{tpu_custom_call.1} parent=1 // pred_check_branch
      %3044 = sbr.rel (0) target = $region193
    $region192: #{tpu_custom_call.1} parent=1 // pred_region
      %3045 = dma.done [#allocation4], 32
    $region193: #{tpu_custom_call.1} parent=1 // pred_fallthru
      _
    %3046 = vsyncpa [#allocation3], 1
    %3047 = vsyncpa [#allocation6], 1
    %3048 = vsyncpa [#allocation9], 1
    %3049 = vsyncpa [#allocation12], 1
    %3050 = vsyncpa [#allocation15], 1
    %3051 = vsyncpa [#allocation18], 1
    %3052 = vsyncpa [#allocation21], 1
    %3053 = vsyncpa [#allocation24], 1
    %3054 = vsyncpa [#allocation27], 1
    %3055 = vsyncpa [#allocation30], 1
    %3056 = vsyncpa [#allocation4], 1

</llo_original>
